<compile_context>
chip_gen: v5e
topology: v5e:2x2
jax: 0.10.0
libtpu: 0.0.40
codegen_flags: <defaults>
</compile_context>

<pallas_src>
import functools

import numpy as np
import jax
import jax.numpy as jnp
from jax import lax
from jax.experimental import pallas as pl
from jax.experimental.pallas import tpu as pltpu


# ----------------------------------------------------------------------------
# Centered 2-D DFT operator (fft2c, ortho norm), built once per (H, W).
# Returns K = [A | B] with shape (HW, 2HW) such that, for a row-major
# flattened image row-vector z,  fft2c(z) = z @ (A + iB)  and
# ifft2c(z) = z @ (A - iB)   (conjugate symmetry of the unitary centered DFT).
# ----------------------------------------------------------------------------
def _centered_dft_1d(n):
    eye = np.eye(n, dtype=np.complex128)
    x = np.fft.ifftshift(eye, axes=0)
    x = np.fft.fft(x, axis=0, norm='ortho')
    return np.fft.fftshift(x, axes=0)


@functools.lru_cache(maxsize=None)
def _fft2c_operator(h, w):
    k_t = np.kron(_centered_dft_1d(h), _centered_dft_1d(w)).T   # (HW, HW)
    op = np.concatenate([k_t.real, k_t.imag], axis=1)           # (HW, 2HW)
    return jnp.asarray(op.astype(np.float32))


# ----------------------------------------------------------------------------
# Kernel: one batch element per grid step.
# Tile layout: rows [0:C] = real coil planes, rows [C:2C] = imag coil planes,
# lanes = flattened spatial H*W.
# ----------------------------------------------------------------------------
def _varnet_block_kernel(x_ref, ref_ref, sens_ref, mask_ref, kop_ref,
                         dcw_ref, wm_ref, bm_ref, out_ref):
    C2 = x_ref.shape[1]          # 2C
    C = C2 // 2
    HW = x_ref.shape[2]

    X = x_ref[0]                 # (2C, HW)  [[xr],[xi]]
    S = sens_ref[0]              # (2C, HW)  [[sr],[si]]
    m = mask_ref[...]            # (1, HW)
    K = kop_ref[...]             # (HW, 2HW) = [A | B]

    # sign mask: +1 on real rows, -1 on imag rows
    row = lax.broadcasted_iota(jnp.int32, (C2, 1), 0)
    sgn = jnp.where(row < C, 1.0, -1.0).astype(jnp.float32)     # (2C, 1)

    def swap(z):                 # swap real/imag halves along sublanes (XLU)
        return pltpu.roll(z, shift=C, axis=0)

    # ---- sens_reduce: sum_c ifft2c(x)_c * conj(sens_c) ----------------------
    # ifft2c(x) = x @ (A - iB): one fused (2C,HW)@(HW,2HW) real matmul.
    P = jnp.dot(X, K, preferred_element_type=jnp.float32)       # (2C, 2HW)
    P1 = P[:, :HW]               # [[xr@A],[xi@A]]
    P2 = P[:, HW:]               # [[xr@B],[xi@B]]
    img = P1 + sgn * swap(P2)    # [[ir],[ii]] : ir = xrA+xiB, ii = xiA-xrB

    red_r = jnp.sum(img * S, axis=0, keepdims=True)             # sum ir*sr+ii*si
    red_i = jnp.sum(swap(img) * S * sgn, axis=0, keepdims=True)  # sum ii*sr-ir*si

    # ---- regularizer model: pointwise 2x2 linear on (real, imag) channels ---
    # TODO(synk): the full E2E-VarNet uses a NormUnet here; this block uses a
    # 1x1-conv (2->2 channel) stand-in as the injected `model` module.
    mr = wm_ref[0, 0] * red_r + wm_ref[0, 1] * red_i + bm_ref[0]   # (1, HW)
    mi = wm_ref[1, 0] * red_r + wm_ref[1, 1] * red_i + bm_ref[1]   # (1, HW)

    # ---- sens_expand: fft2c(model_out * sens) -------------------------------
    E = mr * S - sgn * (mi * swap(S))                    # [[er],[ei]]  (2C, HW)
    Q = jnp.dot(E, K, preferred_element_type=jnp.float32)          # (2C, 2HW)
    Kt = Q[:, :HW] - sgn * swap(Q[:, HW:])               # [[kr],[ki]]

    # ---- soft data consistency + output (full-tile unmasked store) ----------
    dcw = dcw_ref[0]
    out_ref[0] = X - (X - ref_ref[0]) * m * dcw - Kt


# ----------------------------------------------------------------------------
# Wrapper
# ----------------------------------------------------------------------------
@jax.jit
def varnet_block_forward(current_kspace, ref_kspace, mask, sens_maps,
                         dc_weight, model_w, model_b):
    B, C, H, W, _ = current_kspace.shape
    HW = H * W
    f32 = jnp.float32

    def pack(x):                           # (B,C,H,W,2) -> (B, 2C, HW)
        xr = x[..., 0].reshape(B, C, HW)
        xi = x[..., 1].reshape(B, C, HW)
        return jnp.concatenate([xr, xi], axis=1).astype(f32)

    cur_p = pack(current_kspace)
    ref_p = pack(ref_kspace)
    sens_p = pack(sens_maps)

    # mask: (1,1,1,W,1) bool -> (1, HW) float (where(mask, d, 0) == d * mask)
    mask_hw = jnp.broadcast_to(mask[0, 0, :, :, 0], (H, W)).astype(f32)
    mask_hw = mask_hw.reshape(1, HW)

    k_op = _fft2c_operator(H, W)           # cached constant, (HW, 2HW) f32

    dcw = dc_weight.astype(f32).reshape(1)
    wm = model_w.astype(f32)
    bm = model_b.astype(f32)

    big_spec = pl.BlockSpec((1, 2 * C, HW), lambda b: (b, 0, 0))
    # Grid-invariant index map: the operator is DMA'd once across the batch
    # grid. (For large HW, also request pipeline_mode=pl.Buffered(1).)
    op_spec = pl.BlockSpec((HW, 2 * HW), lambda b: (0, 0))
    mask_spec = pl.BlockSpec((1, HW), lambda b: (0, 0))
    smem_spec = pl.BlockSpec(memory_space=pltpu.MemorySpace.SMEM)

    out_p = pl.pallas_call(
        _varnet_block_kernel,
        out_shape=jax.ShapeDtypeStruct((B, 2 * C, HW), f32),
        grid=(B,),
        in_specs=[big_spec, big_spec, big_spec, mask_spec, op_spec,
                  smem_spec, smem_spec, smem_spec],
        out_specs=big_spec,
        compiler_params=pltpu.CompilerParams(
            dimension_semantics=("parallel",)),
    )(cur_p, ref_p, sens_p, mask_hw, k_op, dcw, wm, bm)

    out_r = out_p[:, :C].reshape(B, C, H, W)
    out_i = out_p[:, C:].reshape(B, C, H, W)
    return jnp.stack([out_r, out_i], axis=-1)


# ----------------------------------------------------------------------------
# Pure-JAX reference (mirrors the PyTorch forward on complex arrays)
# ----------------------------------------------------------------------------
def _reference_forward(cur_c, ref_c, mask_b, sens_c, dc_weight, wm, bm):
    def fft2c(x):
        x = jnp.fft.ifftshift(x, axes=(-2, -1))
        x = jnp.fft.fftn(x, axes=(-2, -1), norm='ortho')
        return jnp.fft.fftshift(x, axes=(-2, -1))

    def ifft2c(x):
        x = jnp.fft.ifftshift(x, axes=(-2, -1))
        x = jnp.fft.ifftn(x, axes=(-2, -1), norm='ortho')
        return jnp.fft.fftshift(x, axes=(-2, -1))

    soft_dc = jnp.where(mask_b, cur_c - ref_c,
                        jnp.zeros((), jnp.complex64)) * dc_weight[0]
    red = jnp.sum(ifft2c(cur_c) * jnp.conj(sens_c), axis=1, keepdims=True)
    mr = wm[0, 0] * red.real + wm[0, 1] * red.imag + bm[0]
    mi = wm[1, 0] * red.real + wm[1, 1] * red.imag + bm[1]
    model_out = (mr + 1j * mi).astype(jnp.complex64)
    model_term = fft2c(model_out * sens_c)
    return cur_c - soft_dc - model_term


if __name__ == "__main__":
    key = jax.random.PRNGKey(0)
    B, C, H, W = 2, 4, 16, 16
    k1, k2, k3, k4 = jax.random.split(key, 4)

    current_kspace = jax.random.normal(k1, (B, C, H, W, 2), dtype=jnp.float32)
    ref_kspace = jax.random.normal(k2, (B, C, H, W, 2), dtype=jnp.float32)
    sens_maps = 0.5 * jax.random.normal(k3, (B, C, H, W, 2), dtype=jnp.float32)
    # undersampling mask along the W (phase-encode) axis
    mask = jax.random.uniform(k4, (1, 1, 1, W, 1)) > 0.5

    # deterministic parameters
    dc_weight = jnp.ones((1,), dtype=jnp.float32)                # torch.ones(1)
    model_w = jnp.array([[0.9, -0.1], [0.1, 0.9]], dtype=jnp.float32)
    model_b = jnp.array([0.01, -0.02], dtype=jnp.float32)

    out = varnet_block_forward(current_kspace, ref_kspace, mask, sens_maps,
                               dc_weight, model_w, model_b)
    out = jax.block_until_ready(out)

    # ---- verify against a pure-JAX (jnp.fft) reference ----------------------
    cur_c = current_kspace[..., 0] + 1j * current_kspace[..., 1]
    ref_c = ref_kspace[..., 0] + 1j * ref_kspace[..., 1]
    sens_c = sens_maps[..., 0] + 1j * sens_maps[..., 1]
    mask_b = mask[..., 0]                                        # (1,1,1,W) bool
    ref_out_c = _reference_forward(cur_c, ref_c, mask_b, sens_c,
                                   dc_weight, model_w, model_b)
    ref_out = jnp.stack([ref_out_c.real, ref_out_c.imag], axis=-1)

    assert out.shape == (B, C, H, W, 2), out.shape
    assert jnp.allclose(out, ref_out, atol=2e-3, rtol=2e-3), (
        float(jnp.max(jnp.abs(out - ref_out))))
    print("KERNEL_OK")
</pallas_src>

<mosaic_0001>
module attributes {stable_mosaic.version = 11 : i64} {
  func.func @_varnet_block_kernel(%arg0: i32, %arg1: memref<1x8x256xf32, #tpu.memory_space<vmem>>, %arg2: memref<1x8x256xf32, #tpu.memory_space<vmem>>, %arg3: memref<1x8x256xf32, #tpu.memory_space<vmem>>, %arg4: memref<1x256xf32, #tpu.memory_space<vmem>>, %arg5: memref<256x512xf32, #tpu.memory_space<vmem>>, %arg6: memref<1xf32, #tpu.memory_space<smem>>, %arg7: memref<2x2xf32, #tpu.memory_space<smem>>, %arg8: memref<2xf32, #tpu.memory_space<smem>>, %arg9: memref<1x8x256xf32, #tpu.memory_space<vmem>>) attributes {dimension_semantics = [#tpu.dimension_semantics<parallel>], iteration_bounds = array<i64: 2>, scalar_prefetch = 0 : i64, scratch_operands = 0 : i64, tpu.core_type = #tpu.core_type<tc>, window_params = [{transform_indices = @transform_0, window_bounds = array<i64: 1, 8, 256>}, {transform_indices = @transform_1, window_bounds = array<i64: 1, 8, 256>}, {transform_indices = @transform_2, window_bounds = array<i64: 1, 8, 256>}, {pipeline_mode = #tpu.pipeline_mode<synchronous>, transform_indices = @transform_3, window_bounds = array<i64: 1, 256>}, {pipeline_mode = #tpu.pipeline_mode<synchronous>, transform_indices = @transform_4, window_bounds = array<i64: 256, 512>}, {transform_indices = @transform_5, window_bounds = array<i64: 1>}, {transform_indices = @transform_6, window_bounds = array<i64: 2, 2>}, {transform_indices = @transform_7, window_bounds = array<i64: 2>}, {transform_indices = @transform_8, window_bounds = array<i64: 1, 8, 256>}]} {
    %c0 = arith.constant 0 : index
    %c0_0 = arith.constant 0 : index
    %c0_1 = arith.constant 0 : index
    %0 = vector.load %arg1[%c0, %c0_0, %c0_1] : memref<1x8x256xf32, #tpu.memory_space<vmem>>, vector<1x8x256xf32>
    %1 = vector.shape_cast %0 : vector<1x8x256xf32> to vector<8x256xf32>
    %c0_2 = arith.constant 0 : index
    %c0_3 = arith.constant 0 : index
    %c0_4 = arith.constant 0 : index
    %2 = vector.load %arg3[%c0_2, %c0_3, %c0_4] : memref<1x8x256xf32, #tpu.memory_space<vmem>>, vector<1x8x256xf32>
    %3 = vector.shape_cast %2 : vector<1x8x256xf32> to vector<8x256xf32>
    %c0_5 = arith.constant 0 : index
    %c0_6 = arith.constant 0 : index
    %4 = vector.load %arg4[%c0_5, %c0_6] : memref<1x256xf32, #tpu.memory_space<vmem>>, vector<1x256xf32>
    %c0_7 = arith.constant 0 : index
    %c0_8 = arith.constant 0 : index
    %5 = vector.load %arg5[%c0_7, %c0_8] : memref<256x512xf32, #tpu.memory_space<vmem>>, vector<256x512xf32>
    %6 = tpu.iota {dimensions = array<i32: 0>} : vector<8x1xi32>
    %c4_i32 = arith.constant 4 : i32
    %7 = vector.broadcast %c4_i32 : i32 to vector<8x1xi32>
    %8 = arith.cmpi slt, %6, %7 : vector<8x1xi32>
    %cst = arith.constant 1.000000e+00 : f32
    %cst_9 = arith.constant -1.000000e+00 : f32
    %9 = vector.broadcast %cst : f32 to vector<8x1xf32>
    %10 = vector.broadcast %cst_9 : f32 to vector<8x1xf32>
    %11 = arith.select %8, %9, %10 : vector<8x1xi1>, vector<8x1xf32>
    %cst_10 = arith.constant dense<0.000000e+00> : vector<8x512xf32>
    %12 = tpu.matmul %1, %5, %cst_10 {dimension_numbers = #tpu.dot_dimension_numbers<[1], [0], [0], [1], [0, 0, 1, 1], [], []>} : vector<8x256xf32>, vector<256x512xf32>, vector<8x512xf32> -> vector<8x512xf32>
    %13 = vector.extract_strided_slice %12 {offsets = [0, 0], sizes = [8, 256], strides = [1, 1]} : vector<8x512xf32> to vector<8x256xf32>
    %14 = vector.extract_strided_slice %12 {offsets = [0, 256], sizes = [8, 256], strides = [1, 1]} : vector<8x512xf32> to vector<8x256xf32>
    %c4_i32_11 = arith.constant 4 : i32
    %15 = tpu.dynamic_rotate %14 by %c4_i32_11 dim 0 : vector<8x256xf32>, i32 -> vector<8x256xf32>
    %16 = vector.broadcast %11 : vector<8x1xf32> to vector<8x256xf32>
    %17 = arith.mulf %16, %15 : vector<8x256xf32>
    %18 = arith.addf %13, %17 : vector<8x256xf32>
    %19 = arith.mulf %18, %3 : vector<8x256xf32>
    %cst_12 = arith.constant dense<0.000000e+00> : vector<256xf32>
    %20 = vector.multi_reduction <add>, %19, %cst_12 [0] : vector<8x256xf32> to vector<256xf32>
    %21 = vector.shape_cast %20 : vector<256xf32> to vector<1x256xf32>
    %c4_i32_13 = arith.constant 4 : i32
    %22 = tpu.dynamic_rotate %18 by %c4_i32_13 dim 0 : vector<8x256xf32>, i32 -> vector<8x256xf32>
    %23 = arith.mulf %22, %3 : vector<8x256xf32>
    %24 = vector.broadcast %11 : vector<8x1xf32> to vector<8x256xf32>
    %25 = arith.mulf %23, %24 : vector<8x256xf32>
    %cst_14 = arith.constant dense<0.000000e+00> : vector<256xf32>
    %26 = vector.multi_reduction <add>, %25, %cst_14 [0] : vector<8x256xf32> to vector<256xf32>
    %27 = vector.shape_cast %26 : vector<256xf32> to vector<1x256xf32>
    %c0_15 = arith.constant 0 : index
    %c0_16 = arith.constant 0 : index
    %28 = memref.load %arg7[%c0_15, %c0_16] : memref<2x2xf32, #tpu.memory_space<smem>>
    %29 = vector.broadcast %28 : f32 to vector<1x256xf32>
    %30 = arith.mulf %29, %21 : vector<1x256xf32>
    %c0_17 = arith.constant 0 : index
    %c1 = arith.constant 1 : index
    %31 = memref.load %arg7[%c0_17, %c1] : memref<2x2xf32, #tpu.memory_space<smem>>
    %32 = vector.broadcast %31 : f32 to vector<1x256xf32>
    %33 = arith.mulf %32, %27 : vector<1x256xf32>
    %34 = arith.addf %30, %33 : vector<1x256xf32>
    %c0_18 = arith.constant 0 : index
    %35 = memref.load %arg8[%c0_18] : memref<2xf32, #tpu.memory_space<smem>>
    %36 = vector.broadcast %35 : f32 to vector<1x256xf32>
    %37 = arith.addf %34, %36 : vector<1x256xf32>
    %c1_19 = arith.constant 1 : index
    %c0_20 = arith.constant 0 : index
    %38 = memref.load %arg7[%c1_19, %c0_20] : memref<2x2xf32, #tpu.memory_space<smem>>
    %39 = vector.broadcast %38 : f32 to vector<1x256xf32>
    %40 = arith.mulf %39, %21 : vector<1x256xf32>
    %c1_21 = arith.constant 1 : index
    %c1_22 = arith.constant 1 : index
    %41 = memref.load %arg7[%c1_21, %c1_22] : memref<2x2xf32, #tpu.memory_space<smem>>
    %42 = vector.broadcast %41 : f32 to vector<1x256xf32>
    %43 = arith.mulf %42, %27 : vector<1x256xf32>
    %44 = arith.addf %40, %43 : vector<1x256xf32>
    %c1_23 = arith.constant 1 : index
    %45 = memref.load %arg8[%c1_23] : memref<2xf32, #tpu.memory_space<smem>>
    %46 = vector.broadcast %45 : f32 to vector<1x256xf32>
    %47 = arith.addf %44, %46 : vector<1x256xf32>
    %48 = vector.broadcast %37 : vector<1x256xf32> to vector<8x256xf32>
    %49 = arith.mulf %48, %3 : vector<8x256xf32>
    %c4_i32_24 = arith.constant 4 : i32
    %50 = tpu.dynamic_rotate %3 by %c4_i32_24 dim 0 : vector<8x256xf32>, i32 -> vector<8x256xf32>
    %51 = vector.broadcast %47 : vector<1x256xf32> to vector<8x256xf32>
    %52 = arith.mulf %51, %50 : vector<8x256xf32>
    %53 = vector.broadcast %11 : vector<8x1xf32> to vector<8x256xf32>
    %54 = arith.mulf %53, %52 : vector<8x256xf32>
    %55 = arith.subf %49, %54 : vector<8x256xf32>
    %cst_25 = arith.constant dense<0.000000e+00> : vector<8x512xf32>
    %56 = tpu.matmul %55, %5, %cst_25 {dimension_numbers = #tpu.dot_dimension_numbers<[1], [0], [0], [1], [0, 0, 1, 1], [], []>} : vector<8x256xf32>, vector<256x512xf32>, vector<8x512xf32> -> vector<8x512xf32>
    %57 = vector.extract_strided_slice %56 {offsets = [0, 0], sizes = [8, 256], strides = [1, 1]} : vector<8x512xf32> to vector<8x256xf32>
    %58 = vector.extract_strided_slice %56 {offsets = [0, 256], sizes = [8, 256], strides = [1, 1]} : vector<8x512xf32> to vector<8x256xf32>
    %c4_i32_26 = arith.constant 4 : i32
    %59 = tpu.dynamic_rotate %58 by %c4_i32_26 dim 0 : vector<8x256xf32>, i32 -> vector<8x256xf32>
    %60 = vector.broadcast %11 : vector<8x1xf32> to vector<8x256xf32>
    %61 = arith.mulf %60, %59 : vector<8x256xf32>
    %62 = arith.subf %57, %61 : vector<8x256xf32>
    %c0_27 = arith.constant 0 : index
    %63 = memref.load %arg6[%c0_27] : memref<1xf32, #tpu.memory_space<smem>>
    %c0_28 = arith.constant 0 : index
    %c0_29 = arith.constant 0 : index
    %c0_30 = arith.constant 0 : index
    %64 = vector.load %arg2[%c0_28, %c0_29, %c0_30] : memref<1x8x256xf32, #tpu.memory_space<vmem>>, vector<1x8x256xf32>
    %65 = vector.shape_cast %64 : vector<1x8x256xf32> to vector<8x256xf32>
    %66 = arith.subf %1, %65 : vector<8x256xf32>
    %67 = vector.broadcast %4 : vector<1x256xf32> to vector<8x256xf32>
    %68 = arith.mulf %66, %67 : vector<8x256xf32>
    %69 = vector.broadcast %63 : f32 to vector<8x256xf32>
    %70 = arith.mulf %68, %69 : vector<8x256xf32>
    %71 = arith.subf %1, %70 : vector<8x256xf32>
    %72 = arith.subf %71, %62 : vector<8x256xf32>
    %c0_31 = arith.constant 0 : index
    %c0_32 = arith.constant 0 : index
    %c0_33 = arith.constant 0 : index
    %73 = vector.load %arg9[%c0_31, %c0_32, %c0_33] : memref<1x8x256xf32, #tpu.memory_space<vmem>>, vector<1x8x256xf32>
    %74 = vector.shape_cast %73 : vector<1x8x256xf32> to vector<8x256xf32>
    %75 = vector.shape_cast %72 : vector<8x256xf32> to vector<1x8x256xf32>
    tpu.vector_store %arg9[%c0_31, %c0_32, %c0_33], %75 {strides = array<i32>} : memref<1x8x256xf32, #tpu.memory_space<vmem>>, vector<1x8x256xf32>,
    return
  }
  func.func @transform_0(%arg0: i32) -> (i32, i32, i32) {
    %c0_i32 = arith.constant 0 : i32
    %c0_i32_0 = arith.constant 0 : i32
    %c0_i32_1 = arith.constant 0 : i32
    return %arg0, %c0_i32, %c0_i32_0 : i32, i32, i32
  }
  func.func @transform_1(%arg0: i32) -> (i32, i32, i32) {
    %c0_i32 = arith.constant 0 : i32
    %c0_i32_0 = arith.constant 0 : i32
    %c0_i32_1 = arith.constant 0 : i32
    return %arg0, %c0_i32, %c0_i32_0 : i32, i32, i32
  }
  func.func @transform_2(%arg0: i32) -> (i32, i32, i32) {
    %c0_i32 = arith.constant 0 : i32
    %c0_i32_0 = arith.constant 0 : i32
    %c0_i32_1 = arith.constant 0 : i32
    return %arg0, %c0_i32, %c0_i32_0 : i32, i32, i32
  }
  func.func @transform_3(%arg0: i32) -> (i32, i32) {
    %c0_i32 = arith.constant 0 : i32
    %c0_i32_0 = arith.constant 0 : i32
    %c0_i32_1 = arith.constant 0 : i32
    return %c0_i32, %c0_i32_0 : i32, i32
  }
  func.func @transform_4(%arg0: i32) -> (i32, i32) {
    %c0_i32 = arith.constant 0 : i32
    %c0_i32_0 = arith.constant 0 : i32
    %c0_i32_1 = arith.constant 0 : i32
    return %c0_i32, %c0_i32_0 : i32, i32
  }
  func.func @transform_5(%arg0: i32) -> i32 {
    %c0_i32 = arith.constant 0 : i32
    %c0_i32_0 = arith.constant 0 : i32
    return %c0_i32 : i32
  }
  func.func @transform_6(%arg0: i32) -> (i32, i32) {
    %c0_i32 = arith.constant 0 : i32
    %c0_i32_0 = arith.constant 0 : i32
    %c0_i32_1 = arith.constant 0 : i32
    return %c0_i32, %c0_i32_0 : i32, i32
  }
  func.func @transform_7(%arg0: i32) -> i32 {
    %c0_i32 = arith.constant 0 : i32
    %c0_i32_0 = arith.constant 0 : i32
    return %c0_i32 : i32
  }
  func.func @transform_8(%arg0: i32) -> (i32, i32, i32) {
    %c0_i32 = arith.constant 0 : i32
    %c0_i32_0 = arith.constant 0 : i32
    %c0_i32_1 = arith.constant 0 : i32
    return %arg0, %c0_i32, %c0_i32_0 : i32, i32, i32
  }
}

</mosaic_0001>

<llo_original>
// kernel: squeeze.7
$region0: #{squeeze.7}
  %s0 = inlined_call_operand.vmem [shape: f32[2,4,16,16], index: 0, kind: input, shape index: {}]
  %s1 = inlined_call_operand.vmem [shape: f32[2,4,256], index: 1, kind: output, shape index: {}]
  $region1: #{squeeze.7} parent=0
    #allocation0 [shape = 'u8[16384]{0}', space=vmem, size = 0x4000, scoped, tag = 'scoped mem for output reshape']
    %v2 = vld [vmem:[%s0] ss:$8 sm:$0xf]
    %v3 = vld [vmem:[%s0] ss:$8 sm:$0xf0]
    %vm4 = vcmask 1047556
    %v5 = vsel %vm4, %v3, %v2
    %vm6 = vcmask 130048
    %7 = vst.msk [vmem:[#allocation0] ss:$8 sm:$0x3] %vm6, %v5
    %s8 = scalar_lea.vmem [#allocation0], 4294967281
    %9 = vst.msk [vmem:[%s8] ss:$8 sm:$0xc] %vm6, %v5
    %s10 = scalar_lea.vmem [#allocation0], 4294967266
    %11 = vst.msk [vmem:[%s10] ss:$8 sm:$0x30] %vm6, %v5
    %s12 = scalar_lea.vmem [#allocation0], 4294967251
    %13 = vst.msk [vmem:[%s12] ss:$8 sm:$0xc0] %vm6, %v5
    %s14 = scalar_lea.vmem %s0, 64
    %v15 = vld [vmem:[%s14] ss:$8 sm:$0xf]
    %s16 = scalar_lea.vmem %s0, 64
    %v17 = vld [vmem:[%s16] ss:$8 sm:$0xf0]
    %vm18 = vcmask 1047556
    %v19 = vsel %vm18, %v17, %v15
    %vm20 = vcmask 130048
    %s21 = scalar_lea.vmem [#allocation0], 16
    %22 = vst.msk [vmem:[%s21] ss:$8 sm:$0x3] %vm20, %v19
    %s23 = scalar_lea.vmem [#allocation0], 1
    %24 = vst.msk [vmem:[%s23] ss:$8 sm:$0xc] %vm20, %v19
    %s25 = scalar_lea.vmem [#allocation0], 4294967282
    %26 = vst.msk [vmem:[%s25] ss:$8 sm:$0x30] %vm20, %v19
    %s27 = scalar_lea.vmem [#allocation0], 4294967267
    %28 = vst.msk [vmem:[%s27] ss:$8 sm:$0xc0] %vm20, %v19
    %s29 = scalar_lea.vmem %s0, 7
    %s30 = smov 3
    %v31 = vld [vmem:[%s29] ss:$16 sm:%s30]
    %s32 = scalar_lea.vmem %s0, 7
    %s33 = smov 12
    %v34 = vld [vmem:[%s32] ss:$16 sm:%s33]
    %vm35 = vcmask 1043458
    %v36 = vsel %vm35, %v34, %v31
    %s37 = scalar_lea.vmem %s0, 4294967247
    %s38 = smov 48
    %v39 = vld [vmem:[%s37] ss:$16 sm:%s38]
    %vm40 = vcmask 1045508
    %v41 = vsel %vm40, %v39, %v36
    %s42 = scalar_lea.vmem %s0, 4294967247
    %s43 = smov 192
    %v44 = vld [vmem:[%s42] ss:$16 sm:%s43]
    %vm45 = vcmask 1047558
    %v46 = vsel %vm45, %v44, %v41
    %47 = vrot.lane.b32.xlu0 %v46, 112
    %v48 = vpop.permute.xlu0 %47
    %vm49 = vcmask 1048448
    %50 = vst.msk [vmem:[#allocation0] sm:$0xf] %vm49, %v48
    %s51 = scalar_lea.vmem [#allocation0], 4
    %52 = vst.msk [vmem:[%s51] sm:$0xf0] %vm49, %v48
    %s53 = scalar_lea.vmem %s0, 71
    %s54 = smov 3
    %v55 = vld [vmem:[%s53] ss:$16 sm:%s54]
    %s56 = scalar_lea.vmem %s0, 71
    %s57 = smov 12
    %v58 = vld [vmem:[%s56] ss:$16 sm:%s57]
    %vm59 = vcmask 1043458
    %v60 = vsel %vm59, %v58, %v55
    %s61 = scalar_lea.vmem %s0, 15
    %s62 = smov 48
    %v63 = vld [vmem:[%s61] ss:$16 sm:%s62]
    %vm64 = vcmask 1045508
    %v65 = vsel %vm64, %v63, %v60
    %s66 = scalar_lea.vmem %s0, 15
    %s67 = smov 192
    %v68 = vld [vmem:[%s66] ss:$16 sm:%s67]
    %vm69 = vcmask 1047558
    %v70 = vsel %vm69, %v68, %v65
    %71 = vrot.lane.b32.xlu0 %v70, 112
    %v72 = vpop.permute.xlu0 %71
    %vm73 = vcmask 1048448
    %s74 = scalar_lea.vmem [#allocation0], 16
    %75 = vst.msk [vmem:[%s74] sm:$0xf] %vm73, %v72
    %s76 = scalar_lea.vmem [#allocation0], 20
    %77 = vst.msk [vmem:[%s76] sm:$0xf0] %vm73, %v72
    %s78 = scalar_lea.vmem %s0, 6
    %s79 = smov 3
    %v80 = vld [vmem:[%s78] ss:$16 sm:%s79]
    %s81 = scalar_lea.vmem %s0, 6
    %s82 = smov 12
    %v83 = vld [vmem:[%s81] ss:$16 sm:%s82]
    %vm84 = vcmask 1043458
    %v85 = vsel %vm84, %v83, %v80
    %s86 = scalar_lea.vmem %s0, 4294967246
    %s87 = smov 48
    %v88 = vld [vmem:[%s86] ss:$16 sm:%s87]
    %vm89 = vcmask 1045508
    %v90 = vsel %vm89, %v88, %v85
    %s91 = scalar_lea.vmem %s0, 4294967246
    %s92 = smov 192
    %v93 = vld [vmem:[%s91] ss:$16 sm:%s92]
    %vm94 = vcmask 1047558
    %v95 = vsel %vm94, %v93, %v90
    %96 = vrot.lane.b32.xlu0 %v95, 96
    %v97 = vpop.permute.xlu0 %96
    %vm98 = vcmask 917248
    %99 = vst.msk [vmem:[#allocation0] sm:$0xf] %vm98, %v97
    %s100 = scalar_lea.vmem [#allocation0], 4
    %101 = vst.msk [vmem:[%s100] sm:$0xf0] %vm98, %v97
    %s102 = scalar_lea.vmem %s0, 70
    %s103 = smov 3
    %v104 = vld [vmem:[%s102] ss:$16 sm:%s103]
    %s105 = scalar_lea.vmem %s0, 70
    %s106 = smov 12
    %v107 = vld [vmem:[%s105] ss:$16 sm:%s106]
    %vm108 = vcmask 1043458
    %v109 = vsel %vm108, %v107, %v104
    %s110 = scalar_lea.vmem %s0, 14
    %s111 = smov 48
    %v112 = vld [vmem:[%s110] ss:$16 sm:%s111]
    %vm113 = vcmask 1045508
    %v114 = vsel %vm113, %v112, %v109
    %s115 = scalar_lea.vmem %s0, 14
    %s116 = smov 192
    %v117 = vld [vmem:[%s115] ss:$16 sm:%s116]
    %vm118 = vcmask 1047558
    %v119 = vsel %vm118, %v117, %v114
    %120 = vrot.lane.b32.xlu0 %v119, 96
    %v121 = vpop.permute.xlu0 %120
    %vm122 = vcmask 917248
    %s123 = scalar_lea.vmem [#allocation0], 16
    %124 = vst.msk [vmem:[%s123] sm:$0xf] %vm122, %v121
    %s125 = scalar_lea.vmem [#allocation0], 20
    %126 = vst.msk [vmem:[%s125] sm:$0xf0] %vm122, %v121
    %s127 = scalar_lea.vmem %s0, 5
    %s128 = smov 3
    %v129 = vld [vmem:[%s127] ss:$16 sm:%s128]
    %s130 = scalar_lea.vmem %s0, 5
    %s131 = smov 12
    %v132 = vld [vmem:[%s130] ss:$16 sm:%s131]
    %vm133 = vcmask 1043458
    %v134 = vsel %vm133, %v132, %v129
    %s135 = scalar_lea.vmem %s0, 4294967245
    %s136 = smov 48
    %v137 = vld [vmem:[%s135] ss:$16 sm:%s136]
    %vm138 = vcmask 1045508
    %v139 = vsel %vm138, %v137, %v134
    %s140 = scalar_lea.vmem %s0, 4294967245
    %s141 = smov 192
    %v142 = vld [vmem:[%s140] ss:$16 sm:%s141]
    %vm143 = vcmask 1047558
    %v144 = vsel %vm143, %v142, %v139
    %145 = vrot.lane.b32.xlu0 %v144, 80
    %v146 = vpop.permute.xlu0 %145
    %vm147 = vcmask 786048
    %148 = vst.msk [vmem:[#allocation0] sm:$0xf] %vm147, %v146
    %s149 = scalar_lea.vmem [#allocation0], 4
    %150 = vst.msk [vmem:[%s149] sm:$0xf0] %vm147, %v146
    %s151 = scalar_lea.vmem %s0, 69
    %s152 = smov 3
    %v153 = vld [vmem:[%s151] ss:$16 sm:%s152]
    %s154 = scalar_lea.vmem %s0, 69
    %s155 = smov 12
    %v156 = vld [vmem:[%s154] ss:$16 sm:%s155]
    %vm157 = vcmask 1043458
    %v158 = vsel %vm157, %v156, %v153
    %s159 = scalar_lea.vmem %s0, 13
    %s160 = smov 48
    %v161 = vld [vmem:[%s159] ss:$16 sm:%s160]
    %vm162 = vcmask 1045508
    %v163 = vsel %vm162, %v161, %v158
    %s164 = scalar_lea.vmem %s0, 13
    %s165 = smov 192
    %v166 = vld [vmem:[%s164] ss:$16 sm:%s165]
    %vm167 = vcmask 1047558
    %v168 = vsel %vm167, %v166, %v163
    %169 = vrot.lane.b32.xlu0 %v168, 80
    %v170 = vpop.permute.xlu0 %169
    %vm171 = vcmask 786048
    %s172 = scalar_lea.vmem [#allocation0], 16
    %173 = vst.msk [vmem:[%s172] sm:$0xf] %vm171, %v170
    %s174 = scalar_lea.vmem [#allocation0], 20
    %175 = vst.msk [vmem:[%s174] sm:$0xf0] %vm171, %v170
    %s176 = scalar_lea.vmem %s0, 4
    %s177 = smov 3
    %v178 = vld [vmem:[%s176] ss:$16 sm:%s177]
    %s179 = scalar_lea.vmem %s0, 4
    %s180 = smov 12
    %v181 = vld [vmem:[%s179] ss:$16 sm:%s180]
    %vm182 = vcmask 1043458
    %v183 = vsel %vm182, %v181, %v178
    %s184 = scalar_lea.vmem %s0, 4294967244
    %s185 = smov 48
    %v186 = vld [vmem:[%s184] ss:$16 sm:%s185]
    %vm187 = vcmask 1045508
    %v188 = vsel %vm187, %v186, %v183
    %s189 = scalar_lea.vmem %s0, 4294967244
    %s190 = smov 192
    %v191 = vld [vmem:[%s189] ss:$16 sm:%s190]
    %vm192 = vcmask 1047558
    %v193 = vsel %vm192, %v191, %v188
    %194 = vrot.lane.b32.xlu0 %v193, 64
    %v195 = vpop.permute.xlu0 %194
    %vm196 = vcmask 654848
    %197 = vst.msk [vmem:[#allocation0] sm:$0xf] %vm196, %v195
    %s198 = scalar_lea.vmem [#allocation0], 4
    %199 = vst.msk [vmem:[%s198] sm:$0xf0] %vm196, %v195
    %s200 = scalar_lea.vmem %s0, 68
    %s201 = smov 3
    %v202 = vld [vmem:[%s200] ss:$16 sm:%s201]
    %s203 = scalar_lea.vmem %s0, 68
    %s204 = smov 12
    %v205 = vld [vmem:[%s203] ss:$16 sm:%s204]
    %vm206 = vcmask 1043458
    %v207 = vsel %vm206, %v205, %v202
    %s208 = scalar_lea.vmem %s0, 12
    %s209 = smov 48
    %v210 = vld [vmem:[%s208] ss:$16 sm:%s209]
    %vm211 = vcmask 1045508
    %v212 = vsel %vm211, %v210, %v207
    %s213 = scalar_lea.vmem %s0, 12
    %s214 = smov 192
    %v215 = vld [vmem:[%s213] ss:$16 sm:%s214]
    %vm216 = vcmask 1047558
    %v217 = vsel %vm216, %v215, %v212
    %218 = vrot.lane.b32.xlu0 %v217, 64
    %v219 = vpop.permute.xlu0 %218
    %vm220 = vcmask 654848
    %s221 = scalar_lea.vmem [#allocation0], 16
    %222 = vst.msk [vmem:[%s221] sm:$0xf] %vm220, %v219
    %s223 = scalar_lea.vmem [#allocation0], 20
    %224 = vst.msk [vmem:[%s223] sm:$0xf0] %vm220, %v219
    %s225 = scalar_lea.vmem %s0, 3
    %s226 = smov 3
    %v227 = vld [vmem:[%s225] ss:$16 sm:%s226]
    %s228 = scalar_lea.vmem %s0, 3
    %s229 = smov 12
    %v230 = vld [vmem:[%s228] ss:$16 sm:%s229]
    %vm231 = vcmask 1043458
    %v232 = vsel %vm231, %v230, %v227
    %s233 = scalar_lea.vmem %s0, 4294967243
    %s234 = smov 48
    %v235 = vld [vmem:[%s233] ss:$16 sm:%s234]
    %vm236 = vcmask 1045508
    %v237 = vsel %vm236, %v235, %v232
    %s238 = scalar_lea.vmem %s0, 4294967243
    %s239 = smov 192
    %v240 = vld [vmem:[%s238] ss:$16 sm:%s239]
    %vm241 = vcmask 1047558
    %v242 = vsel %vm241, %v240, %v237
    %243 = vrot.lane.b32.xlu0 %v242, 48
    %v244 = vpop.permute.xlu0 %243
    %vm245 = vcmask 523648
    %246 = vst.msk [vmem:[#allocation0] sm:$0xf] %vm245, %v244
    %s247 = scalar_lea.vmem [#allocation0], 4
    %248 = vst.msk [vmem:[%s247] sm:$0xf0] %vm245, %v244
    %s249 = scalar_lea.vmem %s0, 67
    %s250 = smov 3
    %v251 = vld [vmem:[%s249] ss:$16 sm:%s250]
    %s252 = scalar_lea.vmem %s0, 67
    %s253 = smov 12
    %v254 = vld [vmem:[%s252] ss:$16 sm:%s253]
    %vm255 = vcmask 1043458
    %v256 = vsel %vm255, %v254, %v251
    %s257 = scalar_lea.vmem %s0, 11
    %s258 = smov 48
    %v259 = vld [vmem:[%s257] ss:$16 sm:%s258]
    %vm260 = vcmask 1045508
    %v261 = vsel %vm260, %v259, %v256
    %s262 = scalar_lea.vmem %s0, 11
    %s263 = smov 192
    %v264 = vld [vmem:[%s262] ss:$16 sm:%s263]
    %vm265 = vcmask 1047558
    %v266 = vsel %vm265, %v264, %v261
    %267 = vrot.lane.b32.xlu0 %v266, 48
    %v268 = vpop.permute.xlu0 %267
    %vm269 = vcmask 523648
    %s270 = scalar_lea.vmem [#allocation0], 16
    %271 = vst.msk [vmem:[%s270] sm:$0xf] %vm269, %v268
    %s272 = scalar_lea.vmem [#allocation0], 20
    %273 = vst.msk [vmem:[%s272] sm:$0xf0] %vm269, %v268
    %s274 = scalar_lea.vmem %s0, 2
    %s275 = smov 3
    %v276 = vld [vmem:[%s274] ss:$16 sm:%s275]
    %s277 = scalar_lea.vmem %s0, 2
    %s278 = smov 12
    %v279 = vld [vmem:[%s277] ss:$16 sm:%s278]
    %vm280 = vcmask 1043458
    %v281 = vsel %vm280, %v279, %v276
    %s282 = scalar_lea.vmem %s0, 4294967242
    %s283 = smov 48
    %v284 = vld [vmem:[%s282] ss:$16 sm:%s283]
    %vm285 = vcmask 1045508
    %v286 = vsel %vm285, %v284, %v281
    %s287 = scalar_lea.vmem %s0, 4294967242
    %s288 = smov 192
    %v289 = vld [vmem:[%s287] ss:$16 sm:%s288]
    %vm290 = vcmask 1047558
    %v291 = vsel %vm290, %v289, %v286
    %292 = vrot.lane.b32.xlu0 %v291, 32
    %v293 = vpop.permute.xlu0 %292
    %vm294 = vcmask 392448
    %295 = vst.msk [vmem:[#allocation0] sm:$0xf] %vm294, %v293
    %s296 = scalar_lea.vmem [#allocation0], 4
    %297 = vst.msk [vmem:[%s296] sm:$0xf0] %vm294, %v293
    %s298 = scalar_lea.vmem %s0, 66
    %s299 = smov 3
    %v300 = vld [vmem:[%s298] ss:$16 sm:%s299]
    %s301 = scalar_lea.vmem %s0, 66
    %s302 = smov 12
    %v303 = vld [vmem:[%s301] ss:$16 sm:%s302]
    %vm304 = vcmask 1043458
    %v305 = vsel %vm304, %v303, %v300
    %s306 = scalar_lea.vmem %s0, 10
    %s307 = smov 48
    %v308 = vld [vmem:[%s306] ss:$16 sm:%s307]
    %vm309 = vcmask 1045508
    %v310 = vsel %vm309, %v308, %v305
    %s311 = scalar_lea.vmem %s0, 10
    %s312 = smov 192
    %v313 = vld [vmem:[%s311] ss:$16 sm:%s312]
    %vm314 = vcmask 1047558
    %v315 = vsel %vm314, %v313, %v310
    %316 = vrot.lane.b32.xlu0 %v315, 32
    %v317 = vpop.permute.xlu0 %316
    %vm318 = vcmask 392448
    %s319 = scalar_lea.vmem [#allocation0], 16
    %320 = vst.msk [vmem:[%s319] sm:$0xf] %vm318, %v317
    %s321 = scalar_lea.vmem [#allocation0], 20
    %322 = vst.msk [vmem:[%s321] sm:$0xf0] %vm318, %v317
    %s323 = scalar_lea.vmem %s0, 1
    %s324 = smov 3
    %v325 = vld [vmem:[%s323] ss:$16 sm:%s324]
    %s326 = scalar_lea.vmem %s0, 1
    %s327 = smov 12
    %v328 = vld [vmem:[%s326] ss:$16 sm:%s327]
    %vm329 = vcmask 1043458
    %v330 = vsel %vm329, %v328, %v325
    %s331 = scalar_lea.vmem %s0, 4294967241
    %s332 = smov 48
    %v333 = vld [vmem:[%s331] ss:$16 sm:%s332]
    %vm334 = vcmask 1045508
    %v335 = vsel %vm334, %v333, %v330
    %s336 = scalar_lea.vmem %s0, 4294967241
    %s337 = smov 192
    %v338 = vld [vmem:[%s336] ss:$16 sm:%s337]
    %vm339 = vcmask 1047558
    %v340 = vsel %vm339, %v338, %v335
    %341 = vrot.lane.b32.xlu0 %v340, 16
    %v342 = vpop.permute.xlu0 %341
    %vm343 = vcmask 261248
    %344 = vst.msk [vmem:[#allocation0] sm:$0xf] %vm343, %v342
    %s345 = scalar_lea.vmem [#allocation0], 4
    %346 = vst.msk [vmem:[%s345] sm:$0xf0] %vm343, %v342
    %s347 = scalar_lea.vmem %s0, 65
    %s348 = smov 3
    %v349 = vld [vmem:[%s347] ss:$16 sm:%s348]
    %s350 = scalar_lea.vmem %s0, 65
    %s351 = smov 12
    %v352 = vld [vmem:[%s350] ss:$16 sm:%s351]
    %vm353 = vcmask 1043458
    %v354 = vsel %vm353, %v352, %v349
    %s355 = scalar_lea.vmem %s0, 9
    %s356 = smov 48
    %v357 = vld [vmem:[%s355] ss:$16 sm:%s356]
    %vm358 = vcmask 1045508
    %v359 = vsel %vm358, %v357, %v354
    %s360 = scalar_lea.vmem %s0, 9
    %s361 = smov 192
    %v362 = vld [vmem:[%s360] ss:$16 sm:%s361]
    %vm363 = vcmask 1047558
    %v364 = vsel %vm363, %v362, %v359
    %365 = vrot.lane.b32.xlu0 %v364, 16
    %v366 = vpop.permute.xlu0 %365
    %vm367 = vcmask 261248
    %s368 = scalar_lea.vmem [#allocation0], 16
    %369 = vst.msk [vmem:[%s368] sm:$0xf] %vm367, %v366
    %s370 = scalar_lea.vmem [#allocation0], 20
    %371 = vst.msk [vmem:[%s370] sm:$0xf0] %vm367, %v366
    %s373 = ssub.s32 16, 1
    %v374 = vld [vmem:[#allocation0] sm:%s373]
    %s376 = ssub.s32 16, 1
    %377 = vst [vmem:[%s1] sm:%s376] %v374
    %s378 = scalar_lea.vmem [#allocation0], 8
    %v379 = vld [vmem:[%s378] sm:%s373]
    %s381 = ssub.s32 16, 1
    %s382 = scalar_lea.vmem %s1, 4
    %383 = vst [vmem:[%s382] sm:%s381] %v379
    %s384 = scalar_lea.vmem [#allocation0], 16
    %v385 = vld [vmem:[%s384] sm:%s373]
    %s387 = ssub.s32 16, 1
    %s388 = scalar_lea.vmem %s1, 8
    %389 = vst [vmem:[%s388] sm:%s387] %v385
    %s390 = scalar_lea.vmem [#allocation0], 24
    %v391 = vld [vmem:[%s390] sm:%s373]
    %s393 = ssub.s32 16, 1
    %s394 = scalar_lea.vmem %s1, 12
    %395 = vst [vmem:[%s394] sm:%s393] %v391

// kernel: varnet_block_forward.1
$region0: #{varnet_block_forward.1}
  #allocation0 [shape = 'u32[]', space=smem, size = 0x4, offset = 0x4, fixed_abs, tag = 'smem constant byte address 0x4 - core index']
  #allocation1 [shape = 'u32[72,128]{1,0:T(1,128)}', space=vmem, size = 0x9000, scoped, tag = 'internal scratch']
  #allocation2 [shape = 'f32[1]{0:T(128)S(6)}', space=smem, size = 0x200, scoped, tag = 'scoped memory for varnet_block_forward.1']
  %s0 = inlined_call_operand.vmem [shape: f32[2,8,256], index: 0, kind: input, shape index: {}]
  %s1 = inlined_call_operand.vmem [shape: f32[2,8,256], index: 1, kind: input, shape index: {}]
  %s2 = inlined_call_operand.vmem [shape: f32[2,8,256], index: 2, kind: input, shape index: {}]
  %s3 = inlined_call_operand.vmem [shape: f32[1,256], index: 3, kind: input, shape index: {}]
  %s4 = inlined_call_operand.hbm [shape: f32[256,512], index: 4, kind: input, shape index: {}]
  %s5 = inlined_call_operand.<no memory space> [shape: f32[1], index: 5, kind: input, shape index: {}]
  %s6 = inlined_call_operand.vmem [shape: f32[2,2], index: 6, kind: input, shape index: {}]
  %s7 = inlined_call_operand.vmem [shape: f32[2], index: 7, kind: input, shape index: {}]
  %s8 = inlined_call_operand.vmem [shape: f32[2,8,256], index: 8, kind: output, shape index: {}]
  %s9 = sld [smem:[#allocation0]]
  $region77: #{varnet_block_forward.1} parent=0
    _
  %s11 = ssub.s32 1, %s9
  %s12 = scalar_select 0, %s11, %s9
  %13 = sst [smem:[#allocation2]] %s5
  $region1: #{varnet_block_forward.1} parent=0
    #allocation3 [shape = 'u8[524288]{0}', space=vmem, size = 0x80000, scoped, tag = 'input window, operand 4, single buffered']
    #allocation4 [shape = 's32[2]{0}', space=sflag, size = 0x8, scoped, tag = 'scoped memory for varnet_block_forward.1']
    #allocation5 [shape = 's32[2]{0}', space=sflag, size = 0x8, scoped, tag = 'scoped memory for varnet_block_forward.1']
    #allocation6 [shape = 'u8[1024]{0}', space=smem, size = 0x400, scoped, tag = 'input window, operand 6, single buffered']
    #allocation7 [shape = 'u8[512]{0}', space=smem, size = 0x200, scoped, tag = 'input window, operand 7, single buffered']
    #allocation8 [shape = 's32[1]{0}', space=sflag, size = 0x4, scoped, tag = 'scoped memory for varnet_block_forward.1']
    %14 = vsyncpa [#allocation4], 0
    %15 = vsyncpa [#allocation5], 0
    %16 = vsyncpa [#allocation8], 0
    loop: start=0, step=1, limit=4
    $region2: #{varnet_block_forward.1} parent=1 // loop_pre_header
      _
    $region3: #{varnet_block_forward.1} parent=1 // loop_header
      %s18 = sphi 0, %s22
      %p19 = scmp.ge.s32.totalorder %s18, 4
      %s28 = sphi 0, %s30
      %s31 = sphi 0, %s28
      %s32 = sphi 0, %s31
      %s48 = sphi 0, %s32
      %s54 = sphi 0, %s56
      %s57 = sphi 0, %s54
      %s58 = sphi 0, %s57
      %s74 = sphi 0, %s58
      %s80 = sphi 0, %s82
      %s83 = sphi 0, %s80
      %s84 = sphi 0, %s83
      %s100 = sphi 0, %s84
      %s104 = sphi 0, %s104
      %s106 = sphi 0, %s104
      %s107 = sphi 0, %s106
      %s121 = sphi 0, %s107
      %s125 = sphi 0, %s125
      %s127 = sphi 0, %s125
      %s128 = sphi 0, %s127
      %s142 = sphi 0, %s128
      %s146 = sphi 0, %s146
      %s148 = sphi 0, %s146
      %s149 = sphi 0, %s148
      %s163 = sphi 0, %s149
      %s167 = sphi 0, %s167
      %s169 = sphi 0, %s167
      %s170 = sphi 0, %s169
      %s184 = sphi 0, %s170
      %s188 = sphi 0, %s188
      %s190 = sphi 0, %s188
      %s191 = sphi 0, %s190
      %s205 = sphi 0, %s191
      %s211 = sphi 0, %s213
      %s214 = sphi 0, %s211
      %s215 = sphi 0, %s214
      %s231 = sphi 0, %s215
    $region4: #{varnet_block_forward.1} parent=1 // loop_header_branch
      %21 = sbr.rel (%p19) target = $region8
    $region5: #{varnet_block_forward.1} parent=1 // loop_body
      %s23 = ssub.s32 %s18, 1
      %s24 = ssub.s32 %s18, 2
      %s25 = sadd.s32 %s18, 1
      %s26 = ssub.s32 %s18, %s25
      %p27 = scmp.eq.s32.totalorder %s26, 0
      %s29 = sadd.s32 %s28, 1
      %s30 = scalar_select %p27, %s28, %s29
      %p33 = pneg %p27
      %p34 = scmp.eq.s32.totalorder %s18, 1
      %p35 = por %p33, %p34
      %p36 = scmp.ne.s32.totalorder %s28, %s31
      %p37 = scmp.eq.s32.totalorder %s18, 0
      %p38 = por %p36, %p37
      %p39 = scmp.ne.s32.totalorder %s28, %s31
      %p40 = scmp.eq.s32.totalorder %s23, 1
      %p41 = por %p39, %p40
      %p42 = scmp.ne.s32.totalorder %s31, %s32
      %p43 = scmp.eq.s32.totalorder %s23, 0
      %p44 = por %p42, %p43
      %p45 = scmp.ne.s32.totalorder %s31, %s32
      %p46 = scmp.eq.s32.totalorder %s24, 1
      %p47 = por %p45, %p46
      %p49 = scmp.ne.s32.totalorder %s32, %s48
      %p50 = scmp.eq.s32.totalorder %s24, 0
      %p51 = por %p49, %p50
      %s52 = ssub.s32 %s18, %s25
      %p53 = scmp.eq.s32.totalorder %s52, 0
      %s55 = sadd.s32 %s54, 1
      %s56 = scalar_select %p53, %s54, %s55
      %p59 = pneg %p53
      %p60 = scmp.eq.s32.totalorder %s18, 1
      %p61 = por %p59, %p60
      %p62 = scmp.ne.s32.totalorder %s54, %s57
      %p63 = scmp.eq.s32.totalorder %s18, 0
      %p64 = por %p62, %p63
      %p65 = scmp.ne.s32.totalorder %s54, %s57
      %p66 = scmp.eq.s32.totalorder %s23, 1
      %p67 = por %p65, %p66
      %p68 = scmp.ne.s32.totalorder %s57, %s58
      %p69 = scmp.eq.s32.totalorder %s23, 0
      %p70 = por %p68, %p69
      %p71 = scmp.ne.s32.totalorder %s57, %s58
      %p72 = scmp.eq.s32.totalorder %s24, 1
      %p73 = por %p71, %p72
      %p75 = scmp.ne.s32.totalorder %s58, %s74
      %p76 = scmp.eq.s32.totalorder %s24, 0
      %p77 = por %p75, %p76
      %s78 = ssub.s32 %s18, %s25
      %p79 = scmp.eq.s32.totalorder %s78, 0
      %s81 = sadd.s32 %s80, 1
      %s82 = scalar_select %p79, %s80, %s81
      %p85 = pneg %p79
      %p86 = scmp.eq.s32.totalorder %s18, 1
      %p87 = por %p85, %p86
      %p88 = scmp.ne.s32.totalorder %s80, %s83
      %p89 = scmp.eq.s32.totalorder %s18, 0
      %p90 = por %p88, %p89
      %p91 = scmp.ne.s32.totalorder %s80, %s83
      %p92 = scmp.eq.s32.totalorder %s23, 1
      %p93 = por %p91, %p92
      %p94 = scmp.ne.s32.totalorder %s83, %s84
      %p95 = scmp.eq.s32.totalorder %s23, 0
      %p96 = por %p94, %p95
      %p97 = scmp.ne.s32.totalorder %s83, %s84
      %p98 = scmp.eq.s32.totalorder %s24, 1
      %p99 = por %p97, %p98
      %p101 = scmp.ne.s32.totalorder %s84, %s100
      %p102 = scmp.eq.s32.totalorder %s24, 0
      %p103 = por %p101, %p102
      %s105 = sadd.s32 %s104, 1
      %p108 = scmp.eq.s32.totalorder %s18, 1
      %p109 = scmp.ne.s32.totalorder %s104, %s106
      %p110 = scmp.eq.s32.totalorder %s18, 0
      %p111 = por %p109, %p110
      %p112 = scmp.ne.s32.totalorder %s104, %s106
      %p113 = scmp.eq.s32.totalorder %s23, 1
      %p114 = por %p112, %p113
      %p115 = scmp.ne.s32.totalorder %s106, %s107
      %p116 = scmp.eq.s32.totalorder %s23, 0
      %p117 = por %p115, %p116
      %p118 = scmp.ne.s32.totalorder %s106, %s107
      %p119 = scmp.eq.s32.totalorder %s24, 1
      %p120 = por %p118, %p119
      %p122 = scmp.ne.s32.totalorder %s107, %s121
      %p123 = scmp.eq.s32.totalorder %s24, 0
      %p124 = por %p122, %p123
      %s126 = sadd.s32 %s125, 1
      %p129 = scmp.eq.s32.totalorder %s18, 1
      %p130 = scmp.ne.s32.totalorder %s125, %s127
      %p131 = scmp.eq.s32.totalorder %s18, 0
      %p132 = por %p130, %p131
      %p133 = scmp.ne.s32.totalorder %s125, %s127
      %p134 = scmp.eq.s32.totalorder %s23, 1
      %p135 = por %p133, %p134
      %p136 = scmp.ne.s32.totalorder %s127, %s128
      %p137 = scmp.eq.s32.totalorder %s23, 0
      %p138 = por %p136, %p137
      %p139 = scmp.ne.s32.totalorder %s127, %s128
      %p140 = scmp.eq.s32.totalorder %s24, 1
      %p141 = por %p139, %p140
      %p143 = scmp.ne.s32.totalorder %s128, %s142
      %p144 = scmp.eq.s32.totalorder %s24, 0
      %p145 = por %p143, %p144
      %s147 = sadd.s32 %s146, 1
      %p150 = scmp.eq.s32.totalorder %s18, 1
      %p151 = scmp.ne.s32.totalorder %s146, %s148
      %p152 = scmp.eq.s32.totalorder %s18, 0
      %p153 = por %p151, %p152
      %p154 = scmp.ne.s32.totalorder %s146, %s148
      %p155 = scmp.eq.s32.totalorder %s23, 1
      %p156 = por %p154, %p155
      %p157 = scmp.ne.s32.totalorder %s148, %s149
      %p158 = scmp.eq.s32.totalorder %s23, 0
      %p159 = por %p157, %p158
      %p160 = scmp.ne.s32.totalorder %s148, %s149
      %p161 = scmp.eq.s32.totalorder %s24, 1
      %p162 = por %p160, %p161
      %p164 = scmp.ne.s32.totalorder %s149, %s163
      %p165 = scmp.eq.s32.totalorder %s24, 0
      %p166 = por %p164, %p165
      %s168 = sadd.s32 %s167, 1
      %p171 = scmp.eq.s32.totalorder %s18, 1
      %p172 = scmp.ne.s32.totalorder %s167, %s169
      %p173 = scmp.eq.s32.totalorder %s18, 0
      %p174 = por %p172, %p173
      %p175 = scmp.ne.s32.totalorder %s167, %s169
      %p176 = scmp.eq.s32.totalorder %s23, 1
      %p177 = por %p175, %p176
      %p178 = scmp.ne.s32.totalorder %s169, %s170
      %p179 = scmp.eq.s32.totalorder %s23, 0
      %p180 = por %p178, %p179
      %p181 = scmp.ne.s32.totalorder %s169, %s170
      %p182 = scmp.eq.s32.totalorder %s24, 1
      %p183 = por %p181, %p182
      %p185 = scmp.ne.s32.totalorder %s170, %s184
      %p186 = scmp.eq.s32.totalorder %s24, 0
      %p187 = por %p185, %p186
      %s189 = sadd.s32 %s188, 1
      %p192 = scmp.eq.s32.totalorder %s18, 1
      %p193 = scmp.ne.s32.totalorder %s188, %s190
      %p194 = scmp.eq.s32.totalorder %s18, 0
      %p195 = por %p193, %p194
      %p196 = scmp.ne.s32.totalorder %s188, %s190
      %p197 = scmp.eq.s32.totalorder %s23, 1
      %p198 = por %p196, %p197
      %p199 = scmp.ne.s32.totalorder %s190, %s191
      %p200 = scmp.eq.s32.totalorder %s23, 0
      %p201 = por %p199, %p200
      %p202 = scmp.ne.s32.totalorder %s190, %s191
      %p203 = scmp.eq.s32.totalorder %s24, 1
      %p204 = por %p202, %p203
      %p206 = scmp.ne.s32.totalorder %s191, %s205
      %p207 = scmp.eq.s32.totalorder %s24, 0
      %p208 = por %p206, %p207
      %s209 = ssub.s32 %s18, %s25
      %p210 = scmp.eq.s32.totalorder %s209, 0
      %s212 = sadd.s32 %s211, 1
      %s213 = scalar_select %p210, %s211, %s212
      %p216 = pneg %p210
      %p217 = scmp.eq.s32.totalorder %s18, 1
      %p218 = por %p216, %p217
      %p219 = scmp.ne.s32.totalorder %s211, %s214
      %p220 = scmp.eq.s32.totalorder %s18, 0
      %p221 = por %p219, %p220
      %p222 = scmp.ne.s32.totalorder %s211, %s214
      %p223 = scmp.eq.s32.totalorder %s23, 1
      %p224 = por %p222, %p223
      %p225 = scmp.ne.s32.totalorder %s214, %s215
      %p226 = scmp.eq.s32.totalorder %s23, 0
      %p227 = por %p225, %p226
      %p228 = scmp.ne.s32.totalorder %s214, %s215
      %p229 = scmp.eq.s32.totalorder %s24, 1
      %p230 = por %p228, %p229
      %p232 = scmp.ne.s32.totalorder %s215, %s231
      %p233 = scmp.eq.s32.totalorder %s24, 0
      %p234 = por %p232, %p233
      %p235 = scmp.le.s32.totalorder 1, %s18
      %p236 = scmp.lt.s32.totalorder %s18, 3
      %p237 = pnand %p235, %p236
      %p238 = pneg %p237
      // Predicated region
      $region9: #{varnet_block_forward.1} parent=5 // pred_check
        _
      $region10: #{varnet_block_forward.1} parent=5 // pred_check_branch
        %240 = sbr.rel (%p237) target = $region12
      $region11: #{varnet_block_forward.1} parent=5 // pred_region
        %s241 = ssub.s32 %s18, 1
        // Predicated region
        $region13: #{varnet_block_forward.1} parent=11 // pred_check
          %p242 = pneg %p117
        $region14: #{varnet_block_forward.1} parent=11 // pred_check_branch
          %244 = sbr.rel (%p242) target = $region16
        $region15: #{varnet_block_forward.1} parent=11 // pred_region
          _
        $region16: #{varnet_block_forward.1} parent=11 // pred_fallthru
          _
        // Predicated region
        $region17: #{varnet_block_forward.1} parent=11 // pred_check
          %p245 = pneg %p138
        $region18: #{varnet_block_forward.1} parent=11 // pred_check_branch
          %247 = sbr.rel (%p245) target = $region20
        $region19: #{varnet_block_forward.1} parent=11 // pred_region
          %249 = vsyncadd [#allocation4], 0
          %s250 = sshll.u32 %s4, 4
          %s251 = int_to_ptr.hbm [resolvable:$true] %s250
          %s252 = sshll.u32 [#allocation3], 4
          %s253 = int_to_ptr.vmem [resolvable:$true] %s252
          %258 = dma.hbm_to_vmem [thread:$0]  %s251, 16384, %s253, [#allocation4], 512, 512, 32
        $region20: #{varnet_block_forward.1} parent=11 // pred_fallthru
          _
        // Predicated region
        $region21: #{varnet_block_forward.1} parent=11 // pred_check
          %p259 = pneg %p159
        $region22: #{varnet_block_forward.1} parent=11 // pred_check_branch
          %261 = sbr.rel (%p259) target = $region24
        $region23: #{varnet_block_forward.1} parent=11 // pred_region
          _
        $region24: #{varnet_block_forward.1} parent=11 // pred_fallthru
          _
        // Predicated region
        $region25: #{varnet_block_forward.1} parent=11 // pred_check
          %p262 = pneg %p180
        $region26: #{varnet_block_forward.1} parent=11 // pred_check_branch
          %264 = sbr.rel (%p262) target = $region28
        $region27: #{varnet_block_forward.1} parent=11 // pred_region
          %266 = vsyncadd [#allocation5], 0
          %s268 = sshll.u32 %s6, 4
          %s269 = int_to_ptr.vmem [resolvable:$true] %s268
          %271 = dma.vmem_to_smem %s269, 32, [#allocation6], [#allocation5]
        $region28: #{varnet_block_forward.1} parent=11 // pred_fallthru
          _
        // Predicated region
        $region29: #{varnet_block_forward.1} parent=11 // pred_check
          %p272 = pneg %p201
        $region30: #{varnet_block_forward.1} parent=11 // pred_check_branch
          %274 = sbr.rel (%p272) target = $region32
        $region31: #{varnet_block_forward.1} parent=11 // pred_region
          %276 = vsyncadd [#allocation8], 0
          %s278 = sshll.u32 %s7, 4
          %s279 = int_to_ptr.vmem [resolvable:$true] %s278
          %281 = dma.vmem_to_smem %s279, 16, [#allocation7], [#allocation8]
        $region32: #{varnet_block_forward.1} parent=11 // pred_fallthru
          _
      $region12: #{varnet_block_forward.1} parent=5 // pred_fallthru
        _
      %p282 = scmp.lt.s32.totalorder %s18, 2
      // Predicated region
      $region33: #{varnet_block_forward.1} parent=5 // pred_check
        %p283 = pneg %p282
      $region34: #{varnet_block_forward.1} parent=5 // pred_check_branch
        %285 = sbr.rel (%p283) target = $region36
      $region35: #{varnet_block_forward.1} parent=5 // pred_region
        // Predicated region
        $region37: #{varnet_block_forward.1} parent=35 // pred_check
          %p286 = pneg %p38
        $region38: #{varnet_block_forward.1} parent=35 // pred_check_branch
          %288 = sbr.rel (%p286) target = $region40
        $region39: #{varnet_block_forward.1} parent=35 // pred_region
          %p289 = scmp.lt.s32.totalorder %s18, 1
          %s290 = scalar_select %p289, %s18, 1
          %s291 = smul.addr %s290, 2
          %s292 = smul.addr %s291, 8
          %s293 = scalar_lea.vmem %s0, %s292
        $region40: #{varnet_block_forward.1} parent=35 // pred_fallthru
          _
        // Predicated region
        $region41: #{varnet_block_forward.1} parent=35 // pred_check
          %p294 = pneg %p64
        $region42: #{varnet_block_forward.1} parent=35 // pred_check_branch
          %296 = sbr.rel (%p294) target = $region44
        $region43: #{varnet_block_forward.1} parent=35 // pred_region
          %p297 = scmp.lt.s32.totalorder %s18, 1
          %s298 = scalar_select %p297, %s18, 1
          %s299 = smul.addr %s298, 2
          %s300 = smul.addr %s299, 8
          %s301 = scalar_lea.vmem %s1, %s300
        $region44: #{varnet_block_forward.1} parent=35 // pred_fallthru
          _
        // Predicated region
        $region45: #{varnet_block_forward.1} parent=35 // pred_check
          %p302 = pneg %p90
        $region46: #{varnet_block_forward.1} parent=35 // pred_check_branch
          %304 = sbr.rel (%p302) target = $region48
        $region47: #{varnet_block_forward.1} parent=35 // pred_region
          %p305 = scmp.lt.s32.totalorder %s18, 1
          %s306 = scalar_select %p305, %s18, 1
          %s307 = smul.addr %s306, 2
          %s308 = smul.addr %s307, 8
          %s309 = scalar_lea.vmem %s2, %s308
        $region48: #{varnet_block_forward.1} parent=35 // pred_fallthru
          _
      $region36: #{varnet_block_forward.1} parent=5 // pred_fallthru
        _
      %p310 = scmp.le.s32.totalorder 1, %s18
      %p311 = scmp.lt.s32.totalorder %s18, 3
      %p312 = pnand %p310, %p311
      %p313 = pneg %p312
      // Predicated region
      $region49: #{varnet_block_forward.1} parent=5 // pred_check
        _
      $region50: #{varnet_block_forward.1} parent=5 // pred_check_branch
        %315 = sbr.rel (%p312) target = $region52
      $region51: #{varnet_block_forward.1} parent=5 // pred_region
        %s316 = ssub.s32 %s18, 1
        // Predicated region
        $region53: #{varnet_block_forward.1} parent=51 // pred_check
          %p317 = pneg %p138
        $region54: #{varnet_block_forward.1} parent=51 // pred_check_branch
          %319 = sbr.rel (%p317) target = $region56
        $region55: #{varnet_block_forward.1} parent=51 // pred_region
          %321 = dma.done [#allocation4], 16384
        $region56: #{varnet_block_forward.1} parent=51 // pred_fallthru
          _
        // Predicated region
        $region57: #{varnet_block_forward.1} parent=51 // pred_check
          %p322 = pneg %p180
        $region58: #{varnet_block_forward.1} parent=51 // pred_check_branch
          %324 = sbr.rel (%p322) target = $region60
        $region59: #{varnet_block_forward.1} parent=51 // pred_region
          %326 = dma.done [#allocation5], 32
        $region60: #{varnet_block_forward.1} parent=51 // pred_fallthru
          _
        // Predicated region
        $region61: #{varnet_block_forward.1} parent=51 // pred_check
          %p327 = pneg %p201
        $region62: #{varnet_block_forward.1} parent=51 // pred_check_branch
          %329 = sbr.rel (%p327) target = $region64
        $region63: #{varnet_block_forward.1} parent=51 // pred_region
          %331 = dma.done [#allocation8], 16
        $region64: #{varnet_block_forward.1} parent=51 // pred_fallthru
          _
        %332 = sfence
        %p333 = scmp.lt.s32.totalorder %s23, 1
        %s334 = scalar_select %p333, %s23, 1
        %s335 = smul.addr %s334, 2
        %s336 = smul.addr %s335, 8
        %s337 = scalar_lea.vmem %s0, %s336
        %p338 = pneg %p44
        %p339 = pneg %p41
        %p340 = scmp.lt.s32.totalorder %s23, 1
        %s341 = scalar_select %p340, %s23, 1
        %s342 = smul.addr %s341, 2
        %s343 = smul.addr %s342, 8
        %s344 = scalar_lea.vmem %s1, %s343
        %p345 = pneg %p70
        %p346 = pneg %p67
        %p347 = scmp.lt.s32.totalorder %s23, 1
        %s348 = scalar_select %p347, %s23, 1
        %s349 = smul.addr %s348, 2
        %s350 = smul.addr %s349, 8
        %s351 = scalar_lea.vmem %s2, %s350
        %p352 = pneg %p96
        %p353 = pneg %p93
        %p354 = pneg %p117
        %p355 = pneg %p114
        %p356 = pneg %p138
        %p357 = pneg %p135
        %p358 = pneg %p159
        %p359 = pneg %p156
        %p360 = pneg %p180
        %p361 = pneg %p177
        %p362 = pneg %p201
        %p363 = pneg %p198
        %p364 = pneg %p227
        %p365 = pneg %p224
        %p366 = scmp.lt.s32.totalorder %s23, 1
        %s367 = scalar_select %p366, %s23, 1
        %s368 = smul.addr %s367, 2
        %s369 = smul.addr %s368, 8
        %s370 = scalar_lea.vmem %s8, %s369
        %p371 = scmp.lt.s32.totalorder %s23, 1
        %s372 = scalar_select %p371, %s23, 1
        %s373 = smul.addr %s372, 2
        %s374 = smul.addr %s373, 8
        %s375 = scalar_lea.vmem %s0, %s374
        %p376 = scmp.lt.s32.totalorder %s23, 1
        %s377 = scalar_select %p376, %s23, 1
        %s378 = smul.addr %s377, 2
        %s379 = smul.addr %s378, 8
        %s380 = scalar_lea.vmem %s1, %s379
        %p381 = scmp.lt.s32.totalorder %s23, 1
        %s382 = scalar_select %p381, %s23, 1
        %s383 = smul.addr %s382, 2
        %s384 = smul.addr %s383, 8
        %s385 = scalar_lea.vmem %s2, %s384
        %p386 = scmp.lt.s32.totalorder %s23, 1
        %s387 = scalar_select %p386, %s23, 1
        %s388 = smul.addr %s387, 2
        %s389 = smul.addr %s388, 8
        %s390 = scalar_lea.vmem %s8, %s389
        %v391 = vld [vmem:[%s375] sm:$0xff]
        %v392 = vld [vmem:[%s375 + $0x8] sm:$0xff]
        %v393 = vld [vmem:[%s385] sm:$0xff]
        %v394 = vld [vmem:[%s385 + $0x8] sm:$0xff]
        %v395 = vld [vmem:[%s3] sm:$0x3]
        %v396 = vld [vmem:[#allocation3] sm:$0xff]
        %v397 = vld [vmem:[#allocation3 + $0x8] sm:$0xff]
        %v398 = vld [vmem:[#allocation3 + $0x10] sm:$0xff]
        %v399 = vld [vmem:[#allocation3 + $0x18] sm:$0xff]
        %v400 = vld [vmem:[#allocation3 + $0x20] sm:$0xff]
        %v401 = vld [vmem:[#allocation3 + $0x28] sm:$0xff]
        %v402 = vld [vmem:[#allocation3 + $0x30] sm:$0xff]
        %v403 = vld [vmem:[#allocation3 + $0x38] sm:$0xff]
        %v404 = vld [vmem:[#allocation3 + $0x40] sm:$0xff]
        %v405 = vld [vmem:[#allocation3 + $0x48] sm:$0xff]
        %v406 = vld [vmem:[#allocation3 + $0x50] sm:$0xff]
        %v407 = vld [vmem:[#allocation3 + $0x58] sm:$0xff]
        %v408 = vld [vmem:[#allocation3 + $0x60] sm:$0xff]
        %v409 = vld [vmem:[#allocation3 + $0x68] sm:$0xff]
        %v410 = vld [vmem:[#allocation3 + $0x70] sm:$0xff]
        %v411 = vld [vmem:[#allocation3 + $0x78] sm:$0xff]
        %v412 = vld [vmem:[#allocation3 + $0x80] sm:$0xff]
        %v413 = vld [vmem:[#allocation3 + $0x88] sm:$0xff]
        %v414 = vld [vmem:[#allocation3 + $0x90] sm:$0xff]
        %v415 = vld [vmem:[#allocation3 + $0x98] sm:$0xff]
        %v416 = vld [vmem:[#allocation3 + $0xa0] sm:$0xff]
        %v417 = vld [vmem:[#allocation3 + $0xa8] sm:$0xff]
        %v418 = vld [vmem:[#allocation3 + $0xb0] sm:$0xff]
        %v419 = vld [vmem:[#allocation3 + $0xb8] sm:$0xff]
        %v420 = vld [vmem:[#allocation3 + $0xc0] sm:$0xff]
        %v421 = vld [vmem:[#allocation3 + $0xc8] sm:$0xff]
        %v422 = vld [vmem:[#allocation3 + $0xd0] sm:$0xff]
        %v423 = vld [vmem:[#allocation3 + $0xd8] sm:$0xff]
        %v424 = vld [vmem:[#allocation3 + $0xe0] sm:$0xff]
        %v425 = vld [vmem:[#allocation3 + $0xe8] sm:$0xff]
        %v426 = vld [vmem:[#allocation3 + $0xf0] sm:$0xff]
        %v427 = vld [vmem:[#allocation3 + $0xf8] sm:$0xff]
        %v428 = vld [vmem:[#allocation3 + $0x100] sm:$0xff]
        %v429 = vld [vmem:[#allocation3 + $0x108] sm:$0xff]
        %v430 = vld [vmem:[#allocation3 + $0x110] sm:$0xff]
        %v431 = vld [vmem:[#allocation3 + $0x118] sm:$0xff]
        %v432 = vld [vmem:[#allocation3 + $0x120] sm:$0xff]
        %v433 = vld [vmem:[#allocation3 + $0x128] sm:$0xff]
        %v434 = vld [vmem:[#allocation3 + $0x130] sm:$0xff]
        %v435 = vld [vmem:[#allocation3 + $0x138] sm:$0xff]
        %v436 = vld [vmem:[#allocation3 + $0x140] sm:$0xff]
        %v437 = vld [vmem:[#allocation3 + $0x148] sm:$0xff]
        %v438 = vld [vmem:[#allocation3 + $0x150] sm:$0xff]
        %v439 = vld [vmem:[#allocation3 + $0x158] sm:$0xff]
        %v440 = vld [vmem:[#allocation3 + $0x160] sm:$0xff]
        %v441 = vld [vmem:[#allocation3 + $0x168] sm:$0xff]
        %v442 = vld [vmem:[#allocation3 + $0x170] sm:$0xff]
        %v443 = vld [vmem:[#allocation3 + $0x178] sm:$0xff]
        %v444 = vld [vmem:[#allocation3 + $0x180] sm:$0xff]
        %v445 = vld [vmem:[#allocation3 + $0x188] sm:$0xff]
        %v446 = vld [vmem:[#allocation3 + $0x190] sm:$0xff]
        %v447 = vld [vmem:[#allocation3 + $0x198] sm:$0xff]
        %v448 = vld [vmem:[#allocation3 + $0x1a0] sm:$0xff]
        %v449 = vld [vmem:[#allocation3 + $0x1a8] sm:$0xff]
        %v450 = vld [vmem:[#allocation3 + $0x1b0] sm:$0xff]
        %v451 = vld [vmem:[#allocation3 + $0x1b8] sm:$0xff]
        %v452 = vld [vmem:[#allocation3 + $0x1c0] sm:$0xff]
        %v453 = vld [vmem:[#allocation3 + $0x1c8] sm:$0xff]
        %v454 = vld [vmem:[#allocation3 + $0x1d0] sm:$0xff]
        %v455 = vld [vmem:[#allocation3 + $0x1d8] sm:$0xff]
        %v456 = vld [vmem:[#allocation3 + $0x1e0] sm:$0xff]
        %v457 = vld [vmem:[#allocation3 + $0x1e8] sm:$0xff]
        %v458 = vld [vmem:[#allocation3 + $0x1f0] sm:$0xff]
        %v459 = vld [vmem:[#allocation3 + $0x1f8] sm:$0xff]
        %v460 = vld [vmem:[#allocation3 + $0x200] sm:$0xff]
        %v461 = vld [vmem:[#allocation3 + $0x208] sm:$0xff]
        %v462 = vld [vmem:[#allocation3 + $0x210] sm:$0xff]
        %v463 = vld [vmem:[#allocation3 + $0x218] sm:$0xff]
        %v464 = vld [vmem:[#allocation3 + $0x220] sm:$0xff]
        %v465 = vld [vmem:[#allocation3 + $0x228] sm:$0xff]
        %v466 = vld [vmem:[#allocation3 + $0x230] sm:$0xff]
        %v467 = vld [vmem:[#allocation3 + $0x238] sm:$0xff]
        %v468 = vld [vmem:[#allocation3 + $0x240] sm:$0xff]
        %v469 = vld [vmem:[#allocation3 + $0x248] sm:$0xff]
        %v470 = vld [vmem:[#allocation3 + $0x250] sm:$0xff]
        %v471 = vld [vmem:[#allocation3 + $0x258] sm:$0xff]
        %v472 = vld [vmem:[#allocation3 + $0x260] sm:$0xff]
        %v473 = vld [vmem:[#allocation3 + $0x268] sm:$0xff]
        %v474 = vld [vmem:[#allocation3 + $0x270] sm:$0xff]
        %v475 = vld [vmem:[#allocation3 + $0x278] sm:$0xff]
        %v476 = vld [vmem:[#allocation3 + $0x280] sm:$0xff]
        %v477 = vld [vmem:[#allocation3 + $0x288] sm:$0xff]
        %v478 = vld [vmem:[#allocation3 + $0x290] sm:$0xff]
        %v479 = vld [vmem:[#allocation3 + $0x298] sm:$0xff]
        %v480 = vld [vmem:[#allocation3 + $0x2a0] sm:$0xff]
        %v481 = vld [vmem:[#allocation3 + $0x2a8] sm:$0xff]
        %v482 = vld [vmem:[#allocation3 + $0x2b0] sm:$0xff]
        %v483 = vld [vmem:[#allocation3 + $0x2b8] sm:$0xff]
        %v484 = vld [vmem:[#allocation3 + $0x2c0] sm:$0xff]
        %v485 = vld [vmem:[#allocation3 + $0x2c8] sm:$0xff]
        %v486 = vld [vmem:[#allocation3 + $0x2d0] sm:$0xff]
        %v487 = vld [vmem:[#allocation3 + $0x2d8] sm:$0xff]
        %v488 = vld [vmem:[#allocation3 + $0x2e0] sm:$0xff]
        %v489 = vld [vmem:[#allocation3 + $0x2e8] sm:$0xff]
        %v490 = vld [vmem:[#allocation3 + $0x2f0] sm:$0xff]
        %v491 = vld [vmem:[#allocation3 + $0x2f8] sm:$0xff]
        %v492 = vld [vmem:[#allocation3 + $0x300] sm:$0xff]
        %v493 = vld [vmem:[#allocation3 + $0x308] sm:$0xff]
        %v494 = vld [vmem:[#allocation3 + $0x310] sm:$0xff]
        %v495 = vld [vmem:[#allocation3 + $0x318] sm:$0xff]
        %v496 = vld [vmem:[#allocation3 + $0x320] sm:$0xff]
        %v497 = vld [vmem:[#allocation3 + $0x328] sm:$0xff]
        %v498 = vld [vmem:[#allocation3 + $0x330] sm:$0xff]
        %v499 = vld [vmem:[#allocation3 + $0x338] sm:$0xff]
        %v500 = vld [vmem:[#allocation3 + $0x340] sm:$0xff]
        %v501 = vld [vmem:[#allocation3 + $0x348] sm:$0xff]
        %v502 = vld [vmem:[#allocation3 + $0x350] sm:$0xff]
        %v503 = vld [vmem:[#allocation3 + $0x358] sm:$0xff]
        %v504 = vld [vmem:[#allocation3 + $0x360] sm:$0xff]
        %v505 = vld [vmem:[#allocation3 + $0x368] sm:$0xff]
        %v506 = vld [vmem:[#allocation3 + $0x370] sm:$0xff]
        %v507 = vld [vmem:[#allocation3 + $0x378] sm:$0xff]
        %v508 = vld [vmem:[#allocation3 + $0x380] sm:$0xff]
        %v509 = vld [vmem:[#allocation3 + $0x388] sm:$0xff]
        %v510 = vld [vmem:[#allocation3 + $0x390] sm:$0xff]
        %v511 = vld [vmem:[#allocation3 + $0x398] sm:$0xff]
        %v512 = vld [vmem:[#allocation3 + $0x3a0] sm:$0xff]
        %v513 = vld [vmem:[#allocation3 + $0x3a8] sm:$0xff]
        %v514 = vld [vmem:[#allocation3 + $0x3b0] sm:$0xff]
        %v515 = vld [vmem:[#allocation3 + $0x3b8] sm:$0xff]
        %v516 = vld [vmem:[#allocation3 + $0x3c0] sm:$0xff]
        %v517 = vld [vmem:[#allocation3 + $0x3c8] sm:$0xff]
        %v518 = vld [vmem:[#allocation3 + $0x3d0] sm:$0xff]
        %v519 = vld [vmem:[#allocation3 + $0x3d8] sm:$0xff]
        %v520 = vld [vmem:[#allocation3 + $0x3e0] sm:$0xff]
        %v521 = vld [vmem:[#allocation3 + $0x3e8] sm:$0xff]
        %v522 = vld [vmem:[#allocation3 + $0x3f0] sm:$0xff]
        %v523 = vld [vmem:[#allocation3 + $0x3f8] sm:$0xff]
        %v524 = vlaneseq
        %v525 = vshrl.u32 %v524, 7
        %vm526 = vcmp.lt.s32.totalorder %v525, 4
        %v527 = vsel %vm526, 1.0, -1.0
        %528 = vmatpush.msra.mxu0 %v456
        %529 = vmatpush.msra.mxu0 %v452
        %530 = vmatpush.msra.mxu0 %v448
        %531 = vmatpush.msra.mxu0 %v444
        %532 = vmatpush.msra.mxu0 %v440
        %533 = vmatpush.msra.mxu0 %v436
        %534 = vmatpush.msra.mxu0 %v432
        %535 = vmatpush.msra.mxu0 %v428
        %536 = vmatpush.msra.mxu0 %v424
        %537 = vmatpush.msra.mxu0 %v420
        %538 = vmatpush.msra.mxu0 %v416
        %539 = vmatpush.msra.mxu0 %v412
        %540 = vmatpush.msra.mxu0 %v408
        %541 = vmatpush.msra.mxu0 %v404
        %542 = vmatpush.msra.mxu0 %v400
        %543 = vmatpush.msra.mxu0 %v396
        %544 = vmatmul.f32.gmra.mxu0 %v391
        %v545 = vpop.f32.mrf.mxu0
        %v546 = vadd.f32 0.0, %v545
        %547 = vdwg.mxu0
        %548 = vmatpush.msra.mxu0 %v520
        %549 = vmatpush.msra.mxu0 %v516
        %550 = vmatpush.msra.mxu0 %v512
        %551 = vmatpush.msra.mxu0 %v508
        %552 = vmatpush.msra.mxu0 %v504
        %553 = vmatpush.msra.mxu0 %v500
        %554 = vmatpush.msra.mxu0 %v496
        %555 = vmatpush.msra.mxu0 %v492
        %556 = vmatpush.msra.mxu0 %v488
        %557 = vmatpush.msra.mxu0 %v484
        %558 = vmatpush.msra.mxu0 %v480
        %559 = vmatpush.msra.mxu0 %v476
        %560 = vmatpush.msra.mxu0 %v472
        %561 = vmatpush.msra.mxu0 %v468
        %562 = vmatpush.msra.mxu0 %v464
        %563 = vmatpush.msra.mxu0 %v460
        %564 = vmatmul.f32.gmra.mxu0 %v392
        %v565 = vpop.f32.mrf.mxu0
        %v566 = vadd.f32 %v546, %v565
        %567 = vdwg.mxu0
        %568 = vmatpush.msra.mxu0 %v457
        %569 = vmatpush.msra.mxu0 %v453
        %570 = vmatpush.msra.mxu0 %v449
        %571 = vmatpush.msra.mxu0 %v445
        %572 = vmatpush.msra.mxu0 %v441
        %573 = vmatpush.msra.mxu0 %v437
        %574 = vmatpush.msra.mxu0 %v433
        %575 = vmatpush.msra.mxu0 %v429
        %576 = vmatpush.msra.mxu0 %v425
        %577 = vmatpush.msra.mxu0 %v421
        %578 = vmatpush.msra.mxu0 %v417
        %579 = vmatpush.msra.mxu0 %v413
        %580 = vmatpush.msra.mxu0 %v409
        %581 = vmatpush.msra.mxu0 %v405
        %582 = vmatpush.msra.mxu0 %v401
        %583 = vmatpush.msra.mxu0 %v397
        %584 = vmatmul.f32.gmra.mxu0 %v391
        %v585 = vpop.f32.mrf.mxu0
        %v586 = vadd.f32 0.0, %v585
        %587 = vdwg.mxu0
        %588 = vmatpush.msra.mxu0 %v521
        %589 = vmatpush.msra.mxu0 %v517
        %590 = vmatpush.msra.mxu0 %v513
        %591 = vmatpush.msra.mxu0 %v509
        %592 = vmatpush.msra.mxu0 %v505
        %593 = vmatpush.msra.mxu0 %v501
        %594 = vmatpush.msra.mxu0 %v497
        %595 = vmatpush.msra.mxu0 %v493
        %596 = vmatpush.msra.mxu0 %v489
        %597 = vmatpush.msra.mxu0 %v485
        %598 = vmatpush.msra.mxu0 %v481
        %599 = vmatpush.msra.mxu0 %v477
        %600 = vmatpush.msra.mxu0 %v473
        %601 = vmatpush.msra.mxu0 %v469
        %602 = vmatpush.msra.mxu0 %v465
        %603 = vmatpush.msra.mxu0 %v461
        %604 = vmatmul.f32.gmra.mxu0 %v392
        %v605 = vpop.f32.mrf.mxu0
        %v606 = vadd.f32 %v586, %v605
        %607 = vdwg.mxu0
        %608 = vmatpush.msra.mxu0 %v458
        %609 = vmatpush.msra.mxu0 %v454
        %610 = vmatpush.msra.mxu0 %v450
        %611 = vmatpush.msra.mxu0 %v446
        %612 = vmatpush.msra.mxu0 %v442
        %613 = vmatpush.msra.mxu0 %v438
        %614 = vmatpush.msra.mxu0 %v434
        %615 = vmatpush.msra.mxu0 %v430
        %616 = vmatpush.msra.mxu0 %v426
        %617 = vmatpush.msra.mxu0 %v422
        %618 = vmatpush.msra.mxu0 %v418
        %619 = vmatpush.msra.mxu0 %v414
        %620 = vmatpush.msra.mxu0 %v410
        %621 = vmatpush.msra.mxu0 %v406
        %622 = vmatpush.msra.mxu0 %v402
        %623 = vmatpush.msra.mxu0 %v398
        %624 = vmatmul.f32.gmra.mxu0 %v391
        %v625 = vpop.f32.mrf.mxu0
        %v626 = vadd.f32 0.0, %v625
        %627 = vdwg.mxu0
        %628 = vmatpush.msra.mxu0 %v522
        %629 = vmatpush.msra.mxu0 %v518
        %630 = vmatpush.msra.mxu0 %v514
        %631 = vmatpush.msra.mxu0 %v510
        %632 = vmatpush.msra.mxu0 %v506
        %633 = vmatpush.msra.mxu0 %v502
        %634 = vmatpush.msra.mxu0 %v498
        %635 = vmatpush.msra.mxu0 %v494
        %636 = vmatpush.msra.mxu0 %v490
        %637 = vmatpush.msra.mxu0 %v486
        %638 = vmatpush.msra.mxu0 %v482
        %639 = vmatpush.msra.mxu0 %v478
        %640 = vmatpush.msra.mxu0 %v474
        %641 = vmatpush.msra.mxu0 %v470
        %642 = vmatpush.msra.mxu0 %v466
        %643 = vmatpush.msra.mxu0 %v462
        %644 = vmatmul.f32.gmra.mxu0 %v392
        %v645 = vpop.f32.mrf.mxu0
        %v646 = vadd.f32 %v626, %v645
        %647 = vdwg.mxu0
        %648 = vmatpush.msra.mxu0 %v459
        %649 = vmatpush.msra.mxu0 %v455
        %650 = vmatpush.msra.mxu0 %v451
        %651 = vmatpush.msra.mxu0 %v447
        %652 = vmatpush.msra.mxu0 %v443
        %653 = vmatpush.msra.mxu0 %v439
        %654 = vmatpush.msra.mxu0 %v435
        %655 = vmatpush.msra.mxu0 %v431
        %656 = vmatpush.msra.mxu0 %v427
        %657 = vmatpush.msra.mxu0 %v423
        %658 = vmatpush.msra.mxu0 %v419
        %659 = vmatpush.msra.mxu0 %v415
        %660 = vmatpush.msra.mxu0 %v411
        %661 = vmatpush.msra.mxu0 %v407
        %662 = vmatpush.msra.mxu0 %v403
        %663 = vmatpush.msra.mxu0 %v399
        %664 = vmatmul.f32.gmra.mxu0 %v391
        %v665 = vpop.f32.mrf.mxu0
        %v666 = vadd.f32 0.0, %v665
        %667 = vdwg.mxu0
        %668 = vmatpush.msra.mxu0 %v523
        %669 = vmatpush.msra.mxu0 %v519
        %670 = vmatpush.msra.mxu0 %v515
        %671 = vmatpush.msra.mxu0 %v511
        %672 = vmatpush.msra.mxu0 %v507
        %673 = vmatpush.msra.mxu0 %v503
        %674 = vmatpush.msra.mxu0 %v499
        %675 = vmatpush.msra.mxu0 %v495
        %676 = vmatpush.msra.mxu0 %v491
        %677 = vmatpush.msra.mxu0 %v487
        %678 = vmatpush.msra.mxu0 %v483
        %679 = vmatpush.msra.mxu0 %v479
        %680 = vmatpush.msra.mxu0 %v475
        %681 = vmatpush.msra.mxu0 %v471
        %682 = vmatpush.msra.mxu0 %v467
        %683 = vmatpush.msra.mxu0 %v463
        %684 = vmatmul.f32.gmra.mxu0 %v392
        %v685 = vpop.f32.mrf.mxu0
        %v686 = vadd.f32 %v666, %v685
        %687 = vdwg.mxu0
        %v688 = vrot.slane %v646, 4
        %v689 = vrot.slane %v686, 4
        %v690 = vmul.f32 %v527, %v688
        %v691 = vmul.f32 %v527, %v689
        %v692 = vadd.f32 %v566, %v690
        %v693 = vadd.f32 %v606, %v691
        %v694 = vmul.f32 %v692, %v393
        %v695 = vmul.f32 %v693, %v394
        %v696 = vrot.slane %v694, 4
        %v697 = vadd.f32 %v694, %v696
        %v698 = vrot.slane %v697, 2
        %v699 = vadd.f32 %v697, %v698
        %v700 = vrot.slane %v699, 1
        %v701 = vadd.f32 %v699, %v700
        %v702 = vrot.slane %v695, 4
        %v703 = vadd.f32 %v695, %v702
        %v704 = vrot.slane %v703, 2
        %v705 = vadd.f32 %v703, %v704
        %v706 = vrot.slane %v705, 1
        %v707 = vadd.f32 %v705, %v706
        %v708 = vrot.slane %v692, 4
        %v709 = vrot.slane %v693, 4
        %v710 = vmul.f32 %v708, %v393
        %v711 = vmul.f32 %v709, %v394
        %v712 = vmul.f32 %v710, %v527
        %v713 = vmul.f32 %v711, %v527
        %v714 = vrot.slane %v712, 4
        %v715 = vadd.f32 %v712, %v714
        %v716 = vrot.slane %v715, 2
        %v717 = vadd.f32 %v715, %v716
        %v718 = vrot.slane %v717, 1
        %v719 = vadd.f32 %v717, %v718
        %v720 = vrot.slane %v713, 4
        %v721 = vadd.f32 %v713, %v720
        %v722 = vrot.slane %v721, 2
        %v723 = vadd.f32 %v721, %v722
        %v724 = vrot.slane %v723, 1
        %v725 = vadd.f32 %v723, %v724
        %s726 = sld [smem:[#allocation6]]
        %v727 = vstv %s726
        %v728 = vmul.f32 %v727, %v701
        %v729 = vmul.f32 %v727, %v707
        %s730 = sld [smem:[#allocation6 + $0x1]]
        %v731 = vstv %s730
        %v732 = vmul.f32 %v731, %v719
        %v733 = vmul.f32 %v731, %v725
        %v734 = vadd.f32 %v728, %v732
        %v735 = vadd.f32 %v729, %v733
        %s736 = sld [smem:[#allocation7]]
        %v737 = vstv %s736
        %v738 = vadd.f32 %v734, %v737
        %v739 = vadd.f32 %v735, %v737
        %s740 = sld [smem:[#allocation6 + $0x80]]
        %v741 = vstv %s740
        %v742 = vmul.f32 %v741, %v701
        %v743 = vmul.f32 %v741, %v707
        %s744 = sld [smem:[#allocation6 + $0x81]]
        %v745 = vstv %s744
        %v746 = vmul.f32 %v745, %v719
        %v747 = vmul.f32 %v745, %v725
        %v748 = vadd.f32 %v742, %v746
        %v749 = vadd.f32 %v743, %v747
        %s750 = sld [smem:[#allocation7 + $0x1]]
        %v751 = vstv %s750
        %v752 = vadd.f32 %v748, %v751
        %v753 = vadd.f32 %v749, %v751
        %v754 = vmul.f32 %v738, %v393
        %v755 = vmul.f32 %v739, %v394
        %v756 = vrot.slane %v393, 4
        %v757 = vrot.slane %v394, 4
        %v758 = vmul.f32 %v752, %v756
        %v759 = vmul.f32 %v753, %v757
        %v760 = vmul.f32 %v527, %v758
        %v761 = vmul.f32 %v527, %v759
        %v762 = vsub.f32 %v754, %v760
        %v763 = vsub.f32 %v755, %v761
        %764 = vmatpush.msra.mxu0 %v456
        %765 = vmatpush.msra.mxu0 %v452
        %766 = vmatpush.msra.mxu0 %v448
        %767 = vmatpush.msra.mxu0 %v444
        %768 = vmatpush.msra.mxu0 %v440
        %769 = vmatpush.msra.mxu0 %v436
        %770 = vmatpush.msra.mxu0 %v432
        %771 = vmatpush.msra.mxu0 %v428
        %772 = vmatpush.msra.mxu0 %v424
        %773 = vmatpush.msra.mxu0 %v420
        %774 = vmatpush.msra.mxu0 %v416
        %775 = vmatpush.msra.mxu0 %v412
        %776 = vmatpush.msra.mxu0 %v408
        %777 = vmatpush.msra.mxu0 %v404
        %778 = vmatpush.msra.mxu0 %v400
        %779 = vmatpush.msra.mxu0 %v396
        %780 = vmatmul.f32.gmra.mxu0 %v762
        %v781 = vpop.f32.mrf.mxu0
        %v782 = vadd.f32 0.0, %v781
        %783 = vdwg.mxu0
        %784 = vmatpush.msra.mxu0 %v520
        %785 = vmatpush.msra.mxu0 %v516
        %786 = vmatpush.msra.mxu0 %v512
        %787 = vmatpush.msra.mxu0 %v508
        %788 = vmatpush.msra.mxu0 %v504
        %789 = vmatpush.msra.mxu0 %v500
        %790 = vmatpush.msra.mxu0 %v496
        %791 = vmatpush.msra.mxu0 %v492
        %792 = vmatpush.msra.mxu0 %v488
        %793 = vmatpush.msra.mxu0 %v484
        %794 = vmatpush.msra.mxu0 %v480
        %795 = vmatpush.msra.mxu0 %v476
        %796 = vmatpush.msra.mxu0 %v472
        %797 = vmatpush.msra.mxu0 %v468
        %798 = vmatpush.msra.mxu0 %v464
        %799 = vmatpush.msra.mxu0 %v460
        %800 = vmatmul.f32.gmra.mxu0 %v763
        %v801 = vpop.f32.mrf.mxu0
        %v802 = vadd.f32 %v782, %v801
        %803 = vdwg.mxu0
        %804 = vmatpush.msra.mxu0 %v457
        %805 = vmatpush.msra.mxu0 %v453
        %806 = vmatpush.msra.mxu0 %v449
        %807 = vmatpush.msra.mxu0 %v445
        %808 = vmatpush.msra.mxu0 %v441
        %809 = vmatpush.msra.mxu0 %v437
        %810 = vmatpush.msra.mxu0 %v433
        %811 = vmatpush.msra.mxu0 %v429
        %812 = vmatpush.msra.mxu0 %v425
        %813 = vmatpush.msra.mxu0 %v421
        %814 = vmatpush.msra.mxu0 %v417
        %815 = vmatpush.msra.mxu0 %v413
        %816 = vmatpush.msra.mxu0 %v409
        %817 = vmatpush.msra.mxu0 %v405
        %818 = vmatpush.msra.mxu0 %v401
        %819 = vmatpush.msra.mxu0 %v397
        %820 = vmatmul.f32.gmra.mxu0 %v762
        %v821 = vpop.f32.mrf.mxu0
        %v822 = vadd.f32 0.0, %v821
        %823 = vdwg.mxu0
        %824 = vmatpush.msra.mxu0 %v521
        %825 = vmatpush.msra.mxu0 %v517
        %826 = vmatpush.msra.mxu0 %v513
        %827 = vmatpush.msra.mxu0 %v509
        %828 = vmatpush.msra.mxu0 %v505
        %829 = vmatpush.msra.mxu0 %v501
        %830 = vmatpush.msra.mxu0 %v497
        %831 = vmatpush.msra.mxu0 %v493
        %832 = vmatpush.msra.mxu0 %v489
        %833 = vmatpush.msra.mxu0 %v485
        %834 = vmatpush.msra.mxu0 %v481
        %835 = vmatpush.msra.mxu0 %v477
        %836 = vmatpush.msra.mxu0 %v473
        %837 = vmatpush.msra.mxu0 %v469
        %838 = vmatpush.msra.mxu0 %v465
        %839 = vmatpush.msra.mxu0 %v461
        %840 = vmatmul.f32.gmra.mxu0 %v763
        %v841 = vpop.f32.mrf.mxu0
        %v842 = vadd.f32 %v822, %v841
        %843 = vdwg.mxu0
        %844 = vmatpush.msra.mxu0 %v458
        %845 = vmatpush.msra.mxu0 %v454
        %846 = vmatpush.msra.mxu0 %v450
        %847 = vmatpush.msra.mxu0 %v446
        %848 = vmatpush.msra.mxu0 %v442
        %849 = vmatpush.msra.mxu0 %v438
        %850 = vmatpush.msra.mxu0 %v434
        %851 = vmatpush.msra.mxu0 %v430
        %852 = vmatpush.msra.mxu0 %v426
        %853 = vmatpush.msra.mxu0 %v422
        %854 = vmatpush.msra.mxu0 %v418
        %855 = vmatpush.msra.mxu0 %v414
        %856 = vmatpush.msra.mxu0 %v410
        %857 = vmatpush.msra.mxu0 %v406
        %858 = vmatpush.msra.mxu0 %v402
        %859 = vmatpush.msra.mxu0 %v398
        %860 = vmatmul.f32.gmra.mxu0 %v762
        %v861 = vpop.f32.mrf.mxu0
        %v862 = vadd.f32 0.0, %v861
        %863 = vdwg.mxu0
        %864 = vmatpush.msra.mxu0 %v522
        %865 = vmatpush.msra.mxu0 %v518
        %866 = vmatpush.msra.mxu0 %v514
        %867 = vmatpush.msra.mxu0 %v510
        %868 = vmatpush.msra.mxu0 %v506
        %869 = vmatpush.msra.mxu0 %v502
        %870 = vmatpush.msra.mxu0 %v498
        %871 = vmatpush.msra.mxu0 %v494
        %872 = vmatpush.msra.mxu0 %v490
        %873 = vmatpush.msra.mxu0 %v486
        %874 = vmatpush.msra.mxu0 %v482
        %875 = vmatpush.msra.mxu0 %v478
        %876 = vmatpush.msra.mxu0 %v474
        %877 = vmatpush.msra.mxu0 %v470
        %878 = vmatpush.msra.mxu0 %v466
        %879 = vmatpush.msra.mxu0 %v462
        %880 = vmatmul.f32.gmra.mxu0 %v763
        %v881 = vpop.f32.mrf.mxu0
        %v882 = vadd.f32 %v862, %v881
        %883 = vdwg.mxu0
        %884 = vmatpush.msra.mxu0 %v459
        %885 = vmatpush.msra.mxu0 %v455
        %886 = vmatpush.msra.mxu0 %v451
        %887 = vmatpush.msra.mxu0 %v447
        %888 = vmatpush.msra.mxu0 %v443
        %889 = vmatpush.msra.mxu0 %v439
        %890 = vmatpush.msra.mxu0 %v435
        %891 = vmatpush.msra.mxu0 %v431
        %892 = vmatpush.msra.mxu0 %v427
        %893 = vmatpush.msra.mxu0 %v423
        %894 = vmatpush.msra.mxu0 %v419
        %895 = vmatpush.msra.mxu0 %v415
        %896 = vmatpush.msra.mxu0 %v411
        %897 = vmatpush.msra.mxu0 %v407
        %898 = vmatpush.msra.mxu0 %v403
        %899 = vmatpush.msra.mxu0 %v399
        %900 = vmatmul.f32.gmra.mxu0 %v762
        %v901 = vpop.f32.mrf.mxu0
        %v902 = vadd.f32 0.0, %v901
        %903 = vdwg.mxu0
        %904 = vmatpush.msra.mxu0 %v523
        %905 = vmatpush.msra.mxu0 %v519
        %906 = vmatpush.msra.mxu0 %v515
        %907 = vmatpush.msra.mxu0 %v511
        %908 = vmatpush.msra.mxu0 %v507
        %909 = vmatpush.msra.mxu0 %v503
        %910 = vmatpush.msra.mxu0 %v499
        %911 = vmatpush.msra.mxu0 %v495
        %912 = vmatpush.msra.mxu0 %v491
        %913 = vmatpush.msra.mxu0 %v487
        %914 = vmatpush.msra.mxu0 %v483
        %915 = vmatpush.msra.mxu0 %v479
        %916 = vmatpush.msra.mxu0 %v475
        %917 = vmatpush.msra.mxu0 %v471
        %918 = vmatpush.msra.mxu0 %v467
        %919 = vmatpush.msra.mxu0 %v463
        %920 = vmatmul.f32.gmra.mxu0 %v763
        %v921 = vpop.f32.mrf.mxu0
        %v922 = vadd.f32 %v902, %v921
        %923 = vdwg.mxu0
        %v924 = vrot.slane %v882, 4
        %v925 = vrot.slane %v922, 4
        %v926 = vmul.f32 %v527, %v924
        %v927 = vmul.f32 %v527, %v925
        %v928 = vsub.f32 %v802, %v926
        %v929 = vsub.f32 %v842, %v927
        %s930 = sld [smem:[#allocation2]]
        %v931 = vld [vmem:[%s380] sm:$0xff]
        %v932 = vld [vmem:[%s380 + $0x8] sm:$0xff]
        %v933 = vsub.f32 %v391, %v931
        %v934 = vsub.f32 %v392, %v932
        %v936 = vperm.slane %v395, 0
        %v937 = vperm.slane %v395, 1
        %v940 = vmul.f32 %v933, %v936
        %v941 = vmul.f32 %v934, %v937
        %v942 = vstv %s930
        %v943 = vmul.f32 %v940, %v942
        %v944 = vmul.f32 %v941, %v942
        %v945 = vsub.f32 %v391, %v943
        %v946 = vsub.f32 %v392, %v944
        %v947 = vsub.f32 %v945, %v928
        %v948 = vsub.f32 %v946, %v929
        %949 = vst [vmem:[%s390] sm:$0xff] %v947
        %950 = vst [vmem:[%s390 + $0x8] sm:$0xff] %v948
        %p951 = scmp.lt.s32.totalorder %s23, 1
        %s952 = scalar_select %p951, %s23, 1
        %s953 = smul.addr %s952, 2
        %s954 = smul.addr %s953, 8
        %s955 = scalar_lea.vmem %s8, %s954
        // Predicated region
        $region65: #{varnet_block_forward.1} parent=51 // pred_check
          %p956 = pneg %p224
        $region66: #{varnet_block_forward.1} parent=51 // pred_check_branch
          %958 = sbr.rel (%p956) target = $region68
        $region67: #{varnet_block_forward.1} parent=51 // pred_region
          _
        $region68: #{varnet_block_forward.1} parent=51 // pred_fallthru
          _
      $region52: #{varnet_block_forward.1} parent=5 // pred_fallthru
        _
      %p959 = scmp.le.s32.totalorder 2, %s18
      // Predicated region
      $region69: #{varnet_block_forward.1} parent=5 // pred_check
        %p960 = pneg %p959
      $region70: #{varnet_block_forward.1} parent=5 // pred_check_branch
        %962 = sbr.rel (%p960) target = $region72
      $region71: #{varnet_block_forward.1} parent=5 // pred_region
        %s963 = ssub.s32 %s18, 2
        // Predicated region
        $region73: #{varnet_block_forward.1} parent=71 // pred_check
          %p964 = pneg %p230
        $region74: #{varnet_block_forward.1} parent=71 // pred_check_branch
          %966 = sbr.rel (%p964) target = $region76
        $region75: #{varnet_block_forward.1} parent=71 // pred_region
          %p967 = scmp.lt.s32.totalorder %s24, 1
          %s968 = scalar_select %p967, %s24, 1
          %s969 = smul.addr %s968, 2
          %s970 = smul.addr %s969, 8
          %s971 = scalar_lea.vmem %s8, %s970
        $region76: #{varnet_block_forward.1} parent=71 // pred_fallthru
          _
      $region72: #{varnet_block_forward.1} parent=5 // pred_fallthru
        _
    $region6: #{varnet_block_forward.1} parent=1 // loop_footer
      %s22 = sadd.s32 1, %s18
    $region7: #{varnet_block_forward.1} parent=1 // loop_footer_branch
      %17 = sbr.rel target = $region3
    $region8: #{varnet_block_forward.1} parent=1 // loop_exit
      _
    %972 = vsyncpa [#allocation4], 1
    %s973 = scalar_lea.sflag [#allocation4], 1
    %974 = vsyncpa %s973, 1
    %975 = vsyncpa [#allocation5], 1
    %s976 = scalar_lea.sflag [#allocation5], 1
    %977 = vsyncpa %s976, 1
    %978 = vsyncpa [#allocation8], 1

</llo_original>
